<compile_context>
chip_gen: v7x
topology: tpu7x:2x2x1
jax: 0.10.0
libtpu: 0.0.40
codegen_flags: <defaults>
</compile_context>

<pallas_src>
import functools

import jax
import jax.numpy as jnp
from jax import lax
from jax.experimental import pallas as pl
from jax.experimental.pallas import tpu as pltpu


def _round_up(v, m):
    return (v + m - 1) // m * m


def _pick_row_block(Ho, Wo, cap=2048):
    """Largest divisor of Ho keeping the per-step matmul M-dim (TH*Wo) modest."""
    for th in range(Ho, 0, -1):
        if Ho % th == 0 and th * Wo <= cap:
            return th
    return 1


def _dsc_kernel(x_ref, dww_ref, dwb_ref, pww_ref, pwb_ref, o_ref, xpad_ref, *,
                H, W, Wo, TH, stride, TIN, Cin, Cp, Cpo):
    """One (batch, output-row-block) tile per grid step.

    x_ref  : (1, H, W, Cin)   full (unpadded) NHWC image for this batch element
    dww_ref: (3, 3, Cp)       depthwise weights, BN scale folded, channel-padded
    dwb_ref: (1, Cp)          depthwise BN bias (padded channels -> 0)
    pww_ref: (Cp, Cpo)        pointwise weights, BN scale folded, bf16
    pwb_ref: (1, Cpo)         pointwise BN bias
    o_ref  : (1, TH, Wo, Cpo) output row-block (lane-dense channels)
    xpad_ref: VMEM (TIN, Wpad, Cp) zero-padded input window scratch
    """
    h = pl.program_id(1)
    row0 = h * (TH * stride) - 1          # input row stored in scratch row 0 (may be -1)

    # ---- build zero-padded input window in VMEM (in-kernel padding) ----------
    # Data occupies rows [0,TIN) x cols [1, W+1) x lanes [0, Cin); everything
    # else (spatial border + padded channels) stays zero.
    xpad_ref[...] = jnp.zeros_like(xpad_ref)
    xpad_ref[1:TIN - 1, 1:W + 1, 0:Cin] = x_ref[0, pl.ds(row0 + 1, TIN - 2), :, :]

    @pl.when(row0 >= 0)                   # top halo row (zero at the image top)
    def _():
        xpad_ref[0:1, 1:W + 1, 0:Cin] = x_ref[0, pl.ds(row0, 1), :, :]

    last = row0 + TIN - 1
    @pl.when(last < H)                    # bottom halo row (zero at the image bottom)
    def _():
        xpad_ref[TIN - 1:TIN, 1:W + 1, 0:Cin] = x_ref[0, pl.ds(last, 1), :, :]

    # ---- depthwise 3x3 (+ folded BN bias) + ReLU6 on the VPU (f32) -----------
    xw = xpad_ref[...]                    # (TIN, Wpad, Cp)
    acc = jnp.zeros((TH, Wo, Cp), jnp.float32)
    for kw in range(3):
        # One column-shifted (and, for stride=2, subsampled) view per kw.
        xk = xw[:, kw:kw + stride * (Wo - 1) + 1:stride, :]       # (TIN, Wo, Cp)
        for kh in range(3):
            tap = xk[kh:kh + stride * (TH - 1) + 1:stride, :, :]  # (TH, Wo, Cp)
            acc = acc + tap * dww_ref[kh, kw, :]
    y = jnp.clip(acc + dwb_ref[0], 0.0, 6.0)

    # ---- pointwise 1x1 conv on the MXU: bf16 operands, f32 accumulation ------
    y2 = y.astype(jnp.bfloat16).reshape(TH * Wo, Cp)
    z = jnp.dot(y2, pww_ref[...], preferred_element_type=jnp.float32)
    z = jnp.clip(z + pwb_ref[0], 0.0, 6.0)
    o_ref[0] = z.reshape(TH, Wo, Cpo).astype(o_ref.dtype)


def _fold_bn_and_pad(params, Cp, Cpo):
    """Fold BN scales into the conv weights and zero-pad channels to lane width."""
    dw_w = params["dw_w"] * params["dw_scale"]          # (3,3,Cin) * (1,Cin)
    pw_w = params["pw_w"] * params["pw_scale"]          # (Cin,Cout) * (1,Cout)
    Cin, Cout = pw_w.shape
    dw_w = jnp.pad(dw_w, ((0, 0), (0, 0), (0, Cp - Cin)))
    dw_b = jnp.pad(params["dw_bias"], ((0, 0), (0, Cp - Cin)))
    pw_w = jnp.pad(pw_w, ((0, Cp - Cin), (0, Cpo - Cout))).astype(jnp.bfloat16)
    pw_b = jnp.pad(params["pw_bias"], ((0, 0), (0, Cpo - Cout)))
    return dw_w, dw_b, pw_w, pw_b


@functools.partial(jax.jit, static_argnames=("stride", "row_block"))
def dsc_conv_pallas(x_nchw, params, stride=1, row_block=None):
    """DSCconv forward. x_nchw: (N, Cin, H, W) float32 -> (N, Cout, Ho, Wo)."""
    N, Cin, H, W = x_nchw.shape
    Cout = params["pw_w"].shape[1]
    Ho = (H - 1) // stride + 1            # == (H + 2*1 - 3)//stride + 1
    Wo = (W - 1) // stride + 1
    Cp = _round_up(Cin, 128)              # lane-padded channel counts
    Cpo = _round_up(Cout, 128)

    TH = _pick_row_block(Ho, Wo) if row_block is None else int(row_block)
    assert Ho % TH == 0, "row_block must divide the output height"
    NH = Ho // TH
    TIN = stride * (TH - 1) + 3           # input rows needed per output row-block
    Wpad = _round_up(W + 2, 8)

    # NCHW -> NHWC so channels ride the lane dimension.  Spatial padding and
    # channel padding of the activations happen inside the kernel, so there is
    # no extra HBM round trip for them (only the tiny weights are padded here).
    x = jnp.transpose(x_nchw, (0, 2, 3, 1)).astype(jnp.float32)
    dw_w, dw_b, pw_w, pw_b = _fold_bn_and_pad(params, Cp, Cpo)

    kernel = functools.partial(
        _dsc_kernel, H=H, W=W, Wo=Wo, TH=TH, stride=stride, TIN=TIN,
        Cin=Cin, Cp=Cp, Cpo=Cpo)

    # Rough VMEM budget (double-buffered blocks + scratch + intermediates),
    # clamped so v7x (64 MiB physical) stays comfortably inside ~48 MiB scoped.
    in_blk = H * _round_up(W, 8) * Cp * 4
    out_blk = TH * _round_up(Wo, 8) * Cpo * 4
    scratch_b = TIN * Wpad * Cp * 4
    interm_b = (3 * TIN + 3 * TH) * _round_up(Wo, 8) * Cp * 4 + out_blk
    w_b = 10 * Cp * 4 + Cp * Cpo * 2 + Cpo * 4
    est = 2 * (in_blk + out_blk) + scratch_b + interm_b + w_b
    vmem_limit = int(min(48 * 2 ** 20, max(32 * 2 ** 20, 2 * est)))

    out = pl.pallas_call(
        kernel,
        out_shape=jax.ShapeDtypeStruct((N, Ho, Wo, Cpo), jnp.float32),
        grid_spec=pltpu.PrefetchScalarGridSpec(
            num_scalar_prefetch=0,
            grid=(N, NH),
            in_specs=[
                pl.BlockSpec((1, H, W, Cin), lambda n, h: (n, 0, 0, 0)),
                pl.BlockSpec((3, 3, Cp), lambda n, h: (0, 0, 0)),
                pl.BlockSpec((1, Cp), lambda n, h: (0, 0)),
                pl.BlockSpec((Cp, Cpo), lambda n, h: (0, 0)),
                pl.BlockSpec((1, Cpo), lambda n, h: (0, 0)),
            ],
            out_specs=pl.BlockSpec((1, TH, Wo, Cpo), lambda n, h: (n, h, 0, 0)),
            scratch_shapes=[pltpu.VMEM((TIN, Wpad, Cp), jnp.float32)],
        ),
        compiler_params=pltpu.CompilerParams(
            dimension_semantics=("parallel", "parallel"),
            vmem_limit_bytes=vmem_limit),
    )(x, dw_w, dw_b, pw_w, pw_b)

    # Drop channel padding, NHWC -> NCHW to match the PyTorch module's layout.
    return jnp.transpose(out[..., :Cout], (0, 3, 1, 2))


def make_params(key, in_ch, out_ch, eps=1e-5):
    """Deterministic parameter init (shapes from DSCconv.__init__), BN in eval form."""
    k = jax.random.split(key, 6)
    # depthwise conv weight: torch (in_ch, 1, 3, 3) -> stored as (3, 3, in_ch)
    dw_w = 0.1 * jax.random.normal(k[0], (3, 3, in_ch), jnp.float32)
    # pointwise conv weight: torch (out_ch, in_ch, 1, 1) -> stored as (in_ch, out_ch)
    pw_w = 0.1 * jax.random.normal(k[1], (in_ch, out_ch), jnp.float32)

    dw_gamma = 1.0 + 0.05 * jax.random.normal(k[2], (in_ch,), jnp.float32)
    dw_beta = 0.05 * jax.random.normal(k[3], (in_ch,), jnp.float32)
    dw_mean = jnp.zeros((in_ch,), jnp.float32)
    dw_var = jnp.ones((in_ch,), jnp.float32)

    pw_gamma = 1.0 + 0.05 * jax.random.normal(k[4], (out_ch,), jnp.float32)
    pw_beta = 0.05 * jax.random.normal(k[5], (out_ch,), jnp.float32)
    pw_mean = jnp.zeros((out_ch,), jnp.float32)
    pw_var = jnp.ones((out_ch,), jnp.float32)

    dw_scale = dw_gamma / jnp.sqrt(dw_var + eps)
    dw_bias = dw_beta - dw_mean * dw_scale
    pw_scale = pw_gamma / jnp.sqrt(pw_var + eps)
    pw_bias = pw_beta - pw_mean * pw_scale

    return {
        "dw_w": dw_w,
        "dw_scale": dw_scale.reshape(1, in_ch),
        "dw_bias": dw_bias.reshape(1, in_ch),
        "pw_w": pw_w,
        "pw_scale": pw_scale.reshape(1, out_ch),
        "pw_bias": pw_bias.reshape(1, out_ch),
    }


def dsc_conv_reference(x_nchw, params, stride=1):
    """Pure-JAX (f32) reference of the same forward pass, for validation."""
    N, Cin, H, W = x_nchw.shape
    x = jnp.transpose(x_nchw, (0, 2, 3, 1)).astype(jnp.float32)  # NHWC
    w = params["dw_w"].reshape(3, 3, 1, Cin)  # HWIO, feature_group_count=Cin
    y = lax.conv_general_dilated(
        x, w, window_strides=(stride, stride), padding=((1, 1), (1, 1)),
        dimension_numbers=("NHWC", "HWIO", "NHWC"), feature_group_count=Cin)
    y = jnp.clip(y * params["dw_scale"][0] + params["dw_bias"][0], 0.0, 6.0)
    z = jnp.einsum("nhwc,cd->nhwd", y, params["pw_w"])
    z = jnp.clip(z * params["pw_scale"][0] + params["pw_bias"][0], 0.0, 6.0)
    return jnp.transpose(z, (0, 3, 1, 2))


if __name__ == "__main__":
    key = jax.random.PRNGKey(0)
    k_x, k_p = jax.random.split(key)

    N, in_ch, out_ch, H, W = 2, 4, 8, 16, 16
    stride = 1

    x = jax.random.normal(k_x, (N, in_ch, H, W), jnp.float32)
    params = make_params(k_p, in_ch, out_ch)

    ref = jax.block_until_ready(dsc_conv_reference(x, params, stride=stride))

    # Auto row-blocking.
    out = jax.block_until_ready(dsc_conv_pallas(x, params, stride=stride))
    assert out.shape == ref.shape == (N, out_ch, H // stride, W // stride)
    # bf16 MXU operands (f32 accumulation) -> slightly looser tolerance than f32.
    assert jnp.allclose(out, ref, atol=5e-2, rtol=5e-2), "mismatch vs reference"

    # Explicit 8-row spatial blocks: exercises the multi-row-block / halo path.
    out2 = jax.block_until_ready(
        dsc_conv_pallas(x, params, stride=stride, row_block=8))
    assert jnp.allclose(out2, ref, atol=5e-2, rtol=5e-2), \
        "mismatch vs reference (row_block=8)"

    print("KERNEL_OK")
</pallas_src>

<mosaic_0001>
module attributes {stable_mosaic.version = 11 : i64} {
  func.func @_dsc_kernel(%arg0: i32, %arg1: i32, %arg2: memref<1x16x16x4xf32, #tpu.memory_space<vmem>>, %arg3: memref<3x3x128xf32, #tpu.memory_space<vmem>>, %arg4: memref<1x128xf32, #tpu.memory_space<vmem>>, %arg5: memref<128x128xbf16, #tpu.memory_space<vmem>>, %arg6: memref<1x128xf32, #tpu.memory_space<vmem>>, %arg7: memref<1x16x16x128xf32, #tpu.memory_space<vmem>>, %arg8: memref<18x24x128xf32, #tpu.memory_space<vmem>>) attributes {dimension_semantics = [#tpu.dimension_semantics<parallel>, #tpu.dimension_semantics<parallel>], iteration_bounds = array<i64: 2, 1>, scalar_prefetch = 0 : i64, scratch_operands = 1 : i64, tpu.core_type = #tpu.core_type<tc>, window_params = [{transform_indices = @transform_0, window_bounds = array<i64: 1, 16, 16, 4>}, {pipeline_mode = #tpu.pipeline_mode<synchronous>, transform_indices = @transform_1, window_bounds = array<i64: 3, 3, 128>}, {pipeline_mode = #tpu.pipeline_mode<synchronous>, transform_indices = @transform_2, window_bounds = array<i64: 1, 128>}, {pipeline_mode = #tpu.pipeline_mode<synchronous>, transform_indices = @transform_3, window_bounds = array<i64: 128, 128>}, {pipeline_mode = #tpu.pipeline_mode<synchronous>, transform_indices = @transform_4, window_bounds = array<i64: 1, 128>}, {transform_indices = @transform_5, window_bounds = array<i64: 1, 16, 16, 128>}]} {
    %c16_i32 = arith.constant 16 : i32
    %0 = arith.muli %arg1, %c16_i32 : i32
    %c1_i32 = arith.constant 1 : i32
    %1 = arith.subi %0, %c1_i32 : i32
    %cst = arith.constant 0.000000e+00 : f32
    %2 = vector.broadcast %cst : f32 to vector<18x24x128xf32>
    %c0 = arith.constant 0 : index
    %c0_0 = arith.constant 0 : index
    %c0_1 = arith.constant 0 : index
    %3 = vector.load %arg8[%c0, %c0_0, %c0_1] : memref<18x24x128xf32, #tpu.memory_space<vmem>>, vector<18x24x128xf32>
    tpu.vector_store %arg8[%c0, %c0_0, %c0_1], %2 {strides = array<i32>} : memref<18x24x128xf32, #tpu.memory_space<vmem>>, vector<18x24x128xf32>,
    %c1_i32_2 = arith.constant 1 : i32
    %4 = arith.addi %1, %c1_i32_2 : i32
    %c0_3 = arith.constant 0 : index
    %5 = arith.index_cast %4 : i32 to index
    %c0_4 = arith.constant 0 : index
    %c0_5 = arith.constant 0 : index
    %6 = vector.load %arg2[%c0_3, %5, %c0_4, %c0_5] : memref<1x16x16x4xf32, #tpu.memory_space<vmem>>, vector<1x16x16x4xf32>
    %7 = vector.shape_cast %6 : vector<1x16x16x4xf32> to vector<16x16x4xf32>
    %c1 = arith.constant 1 : index
    %c1_6 = arith.constant 1 : index
    %c0_7 = arith.constant 0 : index
    %8 = vector.load %arg8[%c1, %c1_6, %c0_7] : memref<18x24x128xf32, #tpu.memory_space<vmem>>, vector<16x16x4xf32>
    tpu.vector_store %arg8[%c1, %c1_6, %c0_7], %7 {strides = array<i32>} : memref<18x24x128xf32, #tpu.memory_space<vmem>>, vector<16x16x4xf32>,
    %c0_i32 = arith.constant 0 : i32
    %9 = arith.cmpi sge, %1, %c0_i32 : i32
    %10 = arith.extui %9 : i1 to i32
    %c0_i32_8 = arith.constant 0 : i32
    %11 = arith.cmpi ne, %10, %c0_i32_8 : i32
    scf.if %11 {
      %c0_57 = arith.constant 0 : index
      %111 = arith.index_cast %1 : i32 to index
      %c0_58 = arith.constant 0 : index
      %c0_59 = arith.constant 0 : index
      %112 = vector.load %arg2[%c0_57, %111, %c0_58, %c0_59] : memref<1x16x16x4xf32, #tpu.memory_space<vmem>>, vector<1x1x16x4xf32>
      %113 = vector.shape_cast %112 : vector<1x1x16x4xf32> to vector<1x16x4xf32>
      %c0_60 = arith.constant 0 : index
      %c1_61 = arith.constant 1 : index
      %c0_62 = arith.constant 0 : index
      %114 = vector.load %arg8[%c0_60, %c1_61, %c0_62] : memref<18x24x128xf32, #tpu.memory_space<vmem>>, vector<1x16x4xf32>
      tpu.vector_store %arg8[%c0_60, %c1_61, %c0_62], %113 {strides = array<i32>} : memref<18x24x128xf32, #tpu.memory_space<vmem>>, vector<1x16x4xf32>,
    } else {
    }
    %c18_i32 = arith.constant 18 : i32
    %12 = arith.addi %1, %c18_i32 : i32
    %c1_i32_9 = arith.constant 1 : i32
    %13 = arith.subi %12, %c1_i32_9 : i32
    %c16_i32_10 = arith.constant 16 : i32
    %14 = arith.cmpi slt, %13, %c16_i32_10 : i32
    %15 = arith.extui %14 : i1 to i32
    %c0_i32_11 = arith.constant 0 : i32
    %16 = arith.cmpi ne, %15, %c0_i32_11 : i32
    scf.if %16 {
      %c0_57 = arith.constant 0 : index
      %111 = arith.index_cast %13 : i32 to index
      %c0_58 = arith.constant 0 : index
      %c0_59 = arith.constant 0 : index
      %112 = vector.load %arg2[%c0_57, %111, %c0_58, %c0_59] : memref<1x16x16x4xf32, #tpu.memory_space<vmem>>, vector<1x1x16x4xf32>
      %113 = vector.shape_cast %112 : vector<1x1x16x4xf32> to vector<1x16x4xf32>
      %c17 = arith.constant 17 : index
      %c1_60 = arith.constant 1 : index
      %c0_61 = arith.constant 0 : index
      %114 = vector.load %arg8[%c17, %c1_60, %c0_61] : memref<18x24x128xf32, #tpu.memory_space<vmem>>, vector<1x16x4xf32>
      tpu.vector_store %arg8[%c17, %c1_60, %c0_61], %113 {strides = array<i32>} : memref<18x24x128xf32, #tpu.memory_space<vmem>>, vector<1x16x4xf32>,
    } else {
    }
    %c0_12 = arith.constant 0 : index
    %c0_13 = arith.constant 0 : index
    %c0_14 = arith.constant 0 : index
    %17 = vector.load %arg8[%c0_12, %c0_13, %c0_14] : memref<18x24x128xf32, #tpu.memory_space<vmem>>, vector<18x24x128xf32>
    %cst_15 = arith.constant 0.000000e+00 : f32
    %18 = vector.broadcast %cst_15 : f32 to vector<16x16x128xf32>
    %19 = vector.extract_strided_slice %17 {offsets = [0, 0, 0], sizes = [18, 16, 128], strides = [1, 1, 1]} : vector<18x24x128xf32> to vector<18x16x128xf32>
    %20 = vector.extract_strided_slice %19 {offsets = [0, 0, 0], sizes = [16, 16, 128], strides = [1, 1, 1]} : vector<18x16x128xf32> to vector<16x16x128xf32>
    %c0_16 = arith.constant 0 : index
    %c0_17 = arith.constant 0 : index
    %c0_18 = arith.constant 0 : index
    %21 = vector.load %arg3[%c0_16, %c0_17, %c0_18] : memref<3x3x128xf32, #tpu.memory_space<vmem>>, vector<1x1x128xf32>
    %22 = vector.shape_cast %21 : vector<1x1x128xf32> to vector<128xf32>
    %23 = vector.shape_cast %22 : vector<128xf32> to vector<1x1x128xf32>
    %24 = vector.broadcast %23 : vector<1x1x128xf32> to vector<16x16x128xf32>
    %25 = arith.mulf %20, %24 : vector<16x16x128xf32>
    %26 = arith.addf %18, %25 : vector<16x16x128xf32>
    %27 = vector.extract_strided_slice %19 {offsets = [1, 0, 0], sizes = [16, 16, 128], strides = [1, 1, 1]} : vector<18x16x128xf32> to vector<16x16x128xf32>
    %c1_19 = arith.constant 1 : index
    %c0_20 = arith.constant 0 : index
    %c0_21 = arith.constant 0 : index
    %28 = vector.load %arg3[%c1_19, %c0_20, %c0_21] : memref<3x3x128xf32, #tpu.memory_space<vmem>>, vector<1x1x128xf32>
    %29 = vector.shape_cast %28 : vector<1x1x128xf32> to vector<128xf32>
    %30 = vector.shape_cast %29 : vector<128xf32> to vector<1x1x128xf32>
    %31 = vector.broadcast %30 : vector<1x1x128xf32> to vector<16x16x128xf32>
    %32 = arith.mulf %27, %31 : vector<16x16x128xf32>
    %33 = arith.addf %26, %32 : vector<16x16x128xf32>
    %34 = vector.extract_strided_slice %19 {offsets = [2, 0, 0], sizes = [16, 16, 128], strides = [1, 1, 1]} : vector<18x16x128xf32> to vector<16x16x128xf32>
    %c2 = arith.constant 2 : index
    %c0_22 = arith.constant 0 : index
    %c0_23 = arith.constant 0 : index
    %35 = vector.load %arg3[%c2, %c0_22, %c0_23] : memref<3x3x128xf32, #tpu.memory_space<vmem>>, vector<1x1x128xf32>
    %36 = vector.shape_cast %35 : vector<1x1x128xf32> to vector<128xf32>
    %37 = vector.shape_cast %36 : vector<128xf32> to vector<1x1x128xf32>
    %38 = vector.broadcast %37 : vector<1x1x128xf32> to vector<16x16x128xf32>
    %39 = arith.mulf %34, %38 : vector<16x16x128xf32>
    %40 = arith.addf %33, %39 : vector<16x16x128xf32>
    %41 = vector.extract_strided_slice %17 {offsets = [0, 1, 0], sizes = [18, 16, 128], strides = [1, 1, 1]} : vector<18x24x128xf32> to vector<18x16x128xf32>
    %42 = vector.extract_strided_slice %41 {offsets = [0, 0, 0], sizes = [16, 16, 128], strides = [1, 1, 1]} : vector<18x16x128xf32> to vector<16x16x128xf32>
    %c0_24 = arith.constant 0 : index
    %c1_25 = arith.constant 1 : index
    %c0_26 = arith.constant 0 : index
    %43 = vector.load %arg3[%c0_24, %c1_25, %c0_26] : memref<3x3x128xf32, #tpu.memory_space<vmem>>, vector<1x1x128xf32>
    %44 = vector.shape_cast %43 : vector<1x1x128xf32> to vector<128xf32>
    %45 = vector.shape_cast %44 : vector<128xf32> to vector<1x1x128xf32>
    %46 = vector.broadcast %45 : vector<1x1x128xf32> to vector<16x16x128xf32>
    %47 = arith.mulf %42, %46 : vector<16x16x128xf32>
    %48 = arith.addf %40, %47 : vector<16x16x128xf32>
    %49 = vector.extract_strided_slice %41 {offsets = [1, 0, 0], sizes = [16, 16, 128], strides = [1, 1, 1]} : vector<18x16x128xf32> to vector<16x16x128xf32>
    %c1_27 = arith.constant 1 : index
    %c1_28 = arith.constant 1 : index
    %c0_29 = arith.constant 0 : index
    %50 = vector.load %arg3[%c1_27, %c1_28, %c0_29] : memref<3x3x128xf32, #tpu.memory_space<vmem>>, vector<1x1x128xf32>
    %51 = vector.shape_cast %50 : vector<1x1x128xf32> to vector<128xf32>
    %52 = vector.shape_cast %51 : vector<128xf32> to vector<1x1x128xf32>
    %53 = vector.broadcast %52 : vector<1x1x128xf32> to vector<16x16x128xf32>
    %54 = arith.mulf %49, %53 : vector<16x16x128xf32>
    %55 = arith.addf %48, %54 : vector<16x16x128xf32>
    %56 = vector.extract_strided_slice %41 {offsets = [2, 0, 0], sizes = [16, 16, 128], strides = [1, 1, 1]} : vector<18x16x128xf32> to vector<16x16x128xf32>
    %c2_30 = arith.constant 2 : index
    %c1_31 = arith.constant 1 : index
    %c0_32 = arith.constant 0 : index
    %57 = vector.load %arg3[%c2_30, %c1_31, %c0_32] : memref<3x3x128xf32, #tpu.memory_space<vmem>>, vector<1x1x128xf32>
    %58 = vector.shape_cast %57 : vector<1x1x128xf32> to vector<128xf32>
    %59 = vector.shape_cast %58 : vector<128xf32> to vector<1x1x128xf32>
    %60 = vector.broadcast %59 : vector<1x1x128xf32> to vector<16x16x128xf32>
    %61 = arith.mulf %56, %60 : vector<16x16x128xf32>
    %62 = arith.addf %55, %61 : vector<16x16x128xf32>
    %63 = vector.extract_strided_slice %17 {offsets = [0, 2, 0], sizes = [18, 16, 128], strides = [1, 1, 1]} : vector<18x24x128xf32> to vector<18x16x128xf32>
    %64 = vector.extract_strided_slice %63 {offsets = [0, 0, 0], sizes = [16, 16, 128], strides = [1, 1, 1]} : vector<18x16x128xf32> to vector<16x16x128xf32>
    %c0_33 = arith.constant 0 : index
    %c2_34 = arith.constant 2 : index
    %c0_35 = arith.constant 0 : index
    %65 = vector.load %arg3[%c0_33, %c2_34, %c0_35] : memref<3x3x128xf32, #tpu.memory_space<vmem>>, vector<1x1x128xf32>
    %66 = vector.shape_cast %65 : vector<1x1x128xf32> to vector<128xf32>
    %67 = vector.shape_cast %66 : vector<128xf32> to vector<1x1x128xf32>
    %68 = vector.broadcast %67 : vector<1x1x128xf32> to vector<16x16x128xf32>
    %69 = arith.mulf %64, %68 : vector<16x16x128xf32>
    %70 = arith.addf %62, %69 : vector<16x16x128xf32>
    %71 = vector.extract_strided_slice %63 {offsets = [1, 0, 0], sizes = [16, 16, 128], strides = [1, 1, 1]} : vector<18x16x128xf32> to vector<16x16x128xf32>
    %c1_36 = arith.constant 1 : index
    %c2_37 = arith.constant 2 : index
    %c0_38 = arith.constant 0 : index
    %72 = vector.load %arg3[%c1_36, %c2_37, %c0_38] : memref<3x3x128xf32, #tpu.memory_space<vmem>>, vector<1x1x128xf32>
    %73 = vector.shape_cast %72 : vector<1x1x128xf32> to vector<128xf32>
    %74 = vector.shape_cast %73 : vector<128xf32> to vector<1x1x128xf32>
    %75 = vector.broadcast %74 : vector<1x1x128xf32> to vector<16x16x128xf32>
    %76 = arith.mulf %71, %75 : vector<16x16x128xf32>
    %77 = arith.addf %70, %76 : vector<16x16x128xf32>
    %78 = vector.extract_strided_slice %63 {offsets = [2, 0, 0], sizes = [16, 16, 128], strides = [1, 1, 1]} : vector<18x16x128xf32> to vector<16x16x128xf32>
    %c2_39 = arith.constant 2 : index
    %c2_40 = arith.constant 2 : index
    %c0_41 = arith.constant 0 : index
    %79 = vector.load %arg3[%c2_39, %c2_40, %c0_41] : memref<3x3x128xf32, #tpu.memory_space<vmem>>, vector<1x1x128xf32>
    %80 = vector.shape_cast %79 : vector<1x1x128xf32> to vector<128xf32>
    %81 = vector.shape_cast %80 : vector<128xf32> to vector<1x1x128xf32>
    %82 = vector.broadcast %81 : vector<1x1x128xf32> to vector<16x16x128xf32>
    %83 = arith.mulf %78, %82 : vector<16x16x128xf32>
    %84 = arith.addf %77, %83 : vector<16x16x128xf32>
    %c0_42 = arith.constant 0 : index
    %c0_43 = arith.constant 0 : index
    %85 = vector.load %arg4[%c0_42, %c0_43] : memref<1x128xf32, #tpu.memory_space<vmem>>, vector<1x128xf32>
    %86 = vector.shape_cast %85 : vector<1x128xf32> to vector<128xf32>
    %87 = vector.shape_cast %86 : vector<128xf32> to vector<1x1x128xf32>
    %88 = vector.broadcast %87 : vector<1x1x128xf32> to vector<16x16x128xf32>
    %89 = arith.addf %84, %88 : vector<16x16x128xf32>
    %cst_44 = arith.constant 0.000000e+00 : f32
    %cst_45 = arith.constant 6.000000e+00 : f32
    %90 = vector.broadcast %cst_44 : f32 to vector<16x16x128xf32>
    %91 = arith.maximumf %90, %89 : vector<16x16x128xf32>
    %92 = vector.broadcast %cst_45 : f32 to vector<16x16x128xf32>
    %93 = arith.minimumf %92, %91 : vector<16x16x128xf32>
    %94 = arith.truncf %93 : vector<16x16x128xf32> to vector<16x16x128xbf16>
    %95 = vector.shape_cast %94 : vector<16x16x128xbf16> to vector<256x128xbf16>
    %c0_46 = arith.constant 0 : index
    %c0_47 = arith.constant 0 : index
    %96 = vector.load %arg5[%c0_46, %c0_47] : memref<128x128xbf16, #tpu.memory_space<vmem>>, vector<128x128xbf16>
    %cst_48 = arith.constant dense<0.000000e+00> : vector<256x128xf32>
    %97 = tpu.matmul %95, %96, %cst_48 {dimension_numbers = #tpu.dot_dimension_numbers<[1], [0], [0], [1], [0, 0, 1, 1], [], []>} : vector<256x128xbf16>, vector<128x128xbf16>, vector<256x128xf32> -> vector<256x128xf32>
    %c0_49 = arith.constant 0 : index
    %c0_50 = arith.constant 0 : index
    %98 = vector.load %arg6[%c0_49, %c0_50] : memref<1x128xf32, #tpu.memory_space<vmem>>, vector<1x128xf32>
    %99 = vector.shape_cast %98 : vector<1x128xf32> to vector<128xf32>
    %100 = vector.shape_cast %99 : vector<128xf32> to vector<1x128xf32>
    %101 = vector.broadcast %100 : vector<1x128xf32> to vector<256x128xf32>
    %102 = arith.addf %97, %101 : vector<256x128xf32>
    %cst_51 = arith.constant 0.000000e+00 : f32
    %cst_52 = arith.constant 6.000000e+00 : f32
    %103 = vector.broadcast %cst_51 : f32 to vector<256x128xf32>
    %104 = arith.maximumf %103, %102 : vector<256x128xf32>
    %105 = vector.broadcast %cst_52 : f32 to vector<256x128xf32>
    %106 = arith.minimumf %105, %104 : vector<256x128xf32>
    %107 = vector.shape_cast %106 : vector<256x128xf32> to vector<16x16x128xf32>
    %c0_53 = arith.constant 0 : index
    %c0_54 = arith.constant 0 : index
    %c0_55 = arith.constant 0 : index
    %c0_56 = arith.constant 0 : index
    %108 = vector.load %arg7[%c0_53, %c0_54, %c0_55, %c0_56] : memref<1x16x16x128xf32, #tpu.memory_space<vmem>>, vector<1x16x16x128xf32>
    %109 = vector.shape_cast %108 : vector<1x16x16x128xf32> to vector<16x16x128xf32>
    %110 = vector.shape_cast %107 : vector<16x16x128xf32> to vector<1x16x16x128xf32>
    tpu.vector_store %arg7[%c0_53, %c0_54, %c0_55, %c0_56], %110 {strides = array<i32>} : memref<1x16x16x128xf32, #tpu.memory_space<vmem>>, vector<1x16x16x128xf32>,
    return
  }
  func.func @transform_0(%arg0: i32, %arg1: i32) -> (i32, i32, i32, i32) {
    %c0_i32 = arith.constant 0 : i32
    %c0_i32_0 = arith.constant 0 : i32
    %c0_i32_1 = arith.constant 0 : i32
    %c0_i32_2 = arith.constant 0 : i32
    return %arg0, %c0_i32, %c0_i32_0, %c0_i32_1 : i32, i32, i32, i32
  }
  func.func @transform_1(%arg0: i32, %arg1: i32) -> (i32, i32, i32) {
    %c0_i32 = arith.constant 0 : i32
    %c0_i32_0 = arith.constant 0 : i32
    %c0_i32_1 = arith.constant 0 : i32
    %c0_i32_2 = arith.constant 0 : i32
    return %c0_i32, %c0_i32_0, %c0_i32_1 : i32, i32, i32
  }
  func.func @transform_2(%arg0: i32, %arg1: i32) -> (i32, i32) {
    %c0_i32 = arith.constant 0 : i32
    %c0_i32_0 = arith.constant 0 : i32
    %c0_i32_1 = arith.constant 0 : i32
    return %c0_i32, %c0_i32_0 : i32, i32
  }
  func.func @transform_3(%arg0: i32, %arg1: i32) -> (i32, i32) {
    %c0_i32 = arith.constant 0 : i32
    %c0_i32_0 = arith.constant 0 : i32
    %c0_i32_1 = arith.constant 0 : i32
    return %c0_i32, %c0_i32_0 : i32, i32
  }
  func.func @transform_4(%arg0: i32, %arg1: i32) -> (i32, i32) {
    %c0_i32 = arith.constant 0 : i32
    %c0_i32_0 = arith.constant 0 : i32
    %c0_i32_1 = arith.constant 0 : i32
    return %c0_i32, %c0_i32_0 : i32, i32
  }
  func.func @transform_5(%arg0: i32, %arg1: i32) -> (i32, i32, i32, i32) {
    %c0_i32 = arith.constant 0 : i32
    %c0_i32_0 = arith.constant 0 : i32
    %c0_i32_1 = arith.constant 0 : i32
    return %arg0, %arg1, %c0_i32, %c0_i32_0 : i32, i32, i32, i32
  }
}

</mosaic_0001>

<llo_original>
// kernel: dsc_conv_pallas.1
$region0: #{dsc_conv_pallas.1}
  #allocation0 [shape = 'u32[]', space=smem, size = 0x4, offset = 0x4, fixed_abs, tag = 'smem constant byte address 0x4 - core index']
  #allocation1 [shape = 'u32[144,128]{1,0:T(1,128)}', space=vmem, size = 0x12000, scoped, tag = 'internal scratch']
  #allocation2 [shape = 'f32[18,24,128]{2,1,0:T(8,128)}', space=vmem, size = 0x36000, scoped, tag = 'scratch operand']
  %s0 = inlined_call_operand.vmem [shape: f32[2,16,16,4], index: 0, kind: input, shape index: {}]
  %s1 = inlined_call_operand.vmem [shape: f32[3,3,128], index: 1, kind: input, shape index: {}]
  %s2 = inlined_call_operand.vmem [shape: f32[1,128], index: 2, kind: input, shape index: {}]
  %s3 = inlined_call_operand.vmem [shape: bf16[128,128], index: 3, kind: input, shape index: {}]
  %s4 = inlined_call_operand.vmem [shape: f32[1,128], index: 4, kind: input, shape index: {}]
  %s5 = inlined_call_operand.vmem [shape: f32[2,16,16,128], index: 5, kind: output, shape index: {}]
  %s6 = sld [smem:[#allocation0]]
  $region61: #{dsc_conv_pallas.1} parent=0
    _
  %s8 = ssub.s32 1, %s6
  %s9 = scalar_select 0, %s8, %s6
  loop: start=0, step=1, limit=4
  $region2: #{dsc_conv_pallas.1} parent=0 // loop_pre_header
    _
  $region3: #{dsc_conv_pallas.1} parent=0 // loop_header
    %s11 = sphi 0, %s15
    %p12 = scmp.ge.s32.totalorder %s11, 4
    %s18 = sphi 0, %s30
    %s19 = sphi 0, %s26
    %s20 = sphi 0, %s18
    %s21 = sphi 0, %s19
    %s22 = sphi 0, %s20
    %s23 = sphi 0, %s21
    %s33 = sphi 0, %s35
    %s36 = sphi 0, %s33
    %s37 = sphi 0, %s36
    %s53 = sphi 0, %s37
    %s57 = sphi 0, %s57
    %s59 = sphi 0, %s57
    %s60 = sphi 0, %s59
    %s74 = sphi 0, %s60
    %s78 = sphi 0, %s78
    %s80 = sphi 0, %s78
    %s81 = sphi 0, %s80
    %s95 = sphi 0, %s81
    %s99 = sphi 0, %s99
    %s101 = sphi 0, %s99
    %s102 = sphi 0, %s101
    %s116 = sphi 0, %s102
    %s120 = sphi 0, %s120
    %s122 = sphi 0, %s120
    %s123 = sphi 0, %s122
    %s137 = sphi 0, %s123
    %s145 = sphi 0, %s147
    %s148 = sphi 0, %s145
    %s149 = sphi 0, %s148
    %s165 = sphi 0, %s149
  $region4: #{dsc_conv_pallas.1} parent=0 // loop_header_branch
    %14 = sbr.rel (%p12) target = $region8
  $region5: #{dsc_conv_pallas.1} parent=0 // loop_body
    %s16 = ssub.s32 %s11, 1
    %s17 = ssub.s32 %s11, 2
    %s24 = sadd.s32 1, %s19
    %p25 = scmp.ge.s32.totalorder %s24, 1
    %s26 = scalar_select %p25, 0, %s24
    %s27 = sadd.s32 1, %s18
    %s28 = scalar_select %p25, %s27, %s18
    %p29 = scmp.ge.s32.totalorder %s28, 2
    %s30 = scalar_select %p29, 0, %s28
    %s31 = ssub.s32 %s18, %s30
    %p32 = scmp.eq.s32.totalorder %s31, 0
    %s34 = sadd.s32 %s33, 1
    %s35 = scalar_select %p32, %s33, %s34
    %p38 = pneg %p32
    %p39 = scmp.eq.s32.totalorder %s11, 1
    %p40 = por %p38, %p39
    %p41 = scmp.ne.s32.totalorder %s33, %s36
    %p42 = scmp.eq.s32.totalorder %s11, 0
    %p43 = por %p41, %p42
    %p44 = scmp.ne.s32.totalorder %s33, %s36
    %p45 = scmp.eq.s32.totalorder %s16, 1
    %p46 = por %p44, %p45
    %p47 = scmp.ne.s32.totalorder %s36, %s37
    %p48 = scmp.eq.s32.totalorder %s16, 0
    %p49 = por %p47, %p48
    %p50 = scmp.ne.s32.totalorder %s36, %s37
    %p51 = scmp.eq.s32.totalorder %s17, 1
    %p52 = por %p50, %p51
    %p54 = scmp.ne.s32.totalorder %s37, %s53
    %p55 = scmp.eq.s32.totalorder %s17, 0
    %p56 = por %p54, %p55
    %s58 = sadd.s32 %s57, 1
    %p61 = scmp.eq.s32.totalorder %s11, 1
    %p62 = scmp.ne.s32.totalorder %s57, %s59
    %p63 = scmp.eq.s32.totalorder %s11, 0
    %p64 = por %p62, %p63
    %p65 = scmp.ne.s32.totalorder %s57, %s59
    %p66 = scmp.eq.s32.totalorder %s16, 1
    %p67 = por %p65, %p66
    %p68 = scmp.ne.s32.totalorder %s59, %s60
    %p69 = scmp.eq.s32.totalorder %s16, 0
    %p70 = por %p68, %p69
    %p71 = scmp.ne.s32.totalorder %s59, %s60
    %p72 = scmp.eq.s32.totalorder %s17, 1
    %p73 = por %p71, %p72
    %p75 = scmp.ne.s32.totalorder %s60, %s74
    %p76 = scmp.eq.s32.totalorder %s17, 0
    %p77 = por %p75, %p76
    %s79 = sadd.s32 %s78, 1
    %p82 = scmp.eq.s32.totalorder %s11, 1
    %p83 = scmp.ne.s32.totalorder %s78, %s80
    %p84 = scmp.eq.s32.totalorder %s11, 0
    %p85 = por %p83, %p84
    %p86 = scmp.ne.s32.totalorder %s78, %s80
    %p87 = scmp.eq.s32.totalorder %s16, 1
    %p88 = por %p86, %p87
    %p89 = scmp.ne.s32.totalorder %s80, %s81
    %p90 = scmp.eq.s32.totalorder %s16, 0
    %p91 = por %p89, %p90
    %p92 = scmp.ne.s32.totalorder %s80, %s81
    %p93 = scmp.eq.s32.totalorder %s17, 1
    %p94 = por %p92, %p93
    %p96 = scmp.ne.s32.totalorder %s81, %s95
    %p97 = scmp.eq.s32.totalorder %s17, 0
    %p98 = por %p96, %p97
    %s100 = sadd.s32 %s99, 1
    %p103 = scmp.eq.s32.totalorder %s11, 1
    %p104 = scmp.ne.s32.totalorder %s99, %s101
    %p105 = scmp.eq.s32.totalorder %s11, 0
    %p106 = por %p104, %p105
    %p107 = scmp.ne.s32.totalorder %s99, %s101
    %p108 = scmp.eq.s32.totalorder %s16, 1
    %p109 = por %p107, %p108
    %p110 = scmp.ne.s32.totalorder %s101, %s102
    %p111 = scmp.eq.s32.totalorder %s16, 0
    %p112 = por %p110, %p111
    %p113 = scmp.ne.s32.totalorder %s101, %s102
    %p114 = scmp.eq.s32.totalorder %s17, 1
    %p115 = por %p113, %p114
    %p117 = scmp.ne.s32.totalorder %s102, %s116
    %p118 = scmp.eq.s32.totalorder %s17, 0
    %p119 = por %p117, %p118
    %s121 = sadd.s32 %s120, 1
    %p124 = scmp.eq.s32.totalorder %s11, 1
    %p125 = scmp.ne.s32.totalorder %s120, %s122
    %p126 = scmp.eq.s32.totalorder %s11, 0
    %p127 = por %p125, %p126
    %p128 = scmp.ne.s32.totalorder %s120, %s122
    %p129 = scmp.eq.s32.totalorder %s16, 1
    %p130 = por %p128, %p129
    %p131 = scmp.ne.s32.totalorder %s122, %s123
    %p132 = scmp.eq.s32.totalorder %s16, 0
    %p133 = por %p131, %p132
    %p134 = scmp.ne.s32.totalorder %s122, %s123
    %p135 = scmp.eq.s32.totalorder %s17, 1
    %p136 = por %p134, %p135
    %p138 = scmp.ne.s32.totalorder %s123, %s137
    %p139 = scmp.eq.s32.totalorder %s17, 0
    %p140 = por %p138, %p139
    %s141 = ssub.s32 %s18, %s30
    %s142 = ssub.s32 %s19, %s26
    %s143 = sor.u32 %s141, %s142
    %p144 = scmp.eq.s32.totalorder %s143, 0
    %s146 = sadd.s32 %s145, 1
    %s147 = scalar_select %p144, %s145, %s146
    %p150 = pneg %p144
    %p151 = scmp.eq.s32.totalorder %s11, 1
    %p152 = por %p150, %p151
    %p153 = scmp.ne.s32.totalorder %s145, %s148
    %p154 = scmp.eq.s32.totalorder %s11, 0
    %p155 = por %p153, %p154
    %p156 = scmp.ne.s32.totalorder %s145, %s148
    %p157 = scmp.eq.s32.totalorder %s16, 1
    %p158 = por %p156, %p157
    %p159 = scmp.ne.s32.totalorder %s148, %s149
    %p160 = scmp.eq.s32.totalorder %s16, 0
    %p161 = por %p159, %p160
    %p162 = scmp.ne.s32.totalorder %s148, %s149
    %p163 = scmp.eq.s32.totalorder %s17, 1
    %p164 = por %p162, %p163
    %p166 = scmp.ne.s32.totalorder %s149, %s165
    %p167 = scmp.eq.s32.totalorder %s17, 0
    %p168 = por %p166, %p167
    %p169 = scmp.le.s32.totalorder 1, %s11
    %p170 = scmp.lt.s32.totalorder %s11, 3
    %p171 = pnand %p169, %p170
    %p172 = pneg %p171
    // Predicated region
    $region9: #{dsc_conv_pallas.1} parent=5 // pred_check
      _
    $region10: #{dsc_conv_pallas.1} parent=5 // pred_check_branch
      %174 = sbr.rel (%p171) target = $region12
    $region11: #{dsc_conv_pallas.1} parent=5 // pred_region
      %s175 = ssub.s32 %s11, 1
      // Predicated region
      $region13: #{dsc_conv_pallas.1} parent=11 // pred_check
        %p176 = pneg %p70
      $region14: #{dsc_conv_pallas.1} parent=11 // pred_check_branch
        %178 = sbr.rel (%p176) target = $region16
      $region15: #{dsc_conv_pallas.1} parent=11 // pred_region
        _
      $region16: #{dsc_conv_pallas.1} parent=11 // pred_fallthru
        _
      // Predicated region
      $region17: #{dsc_conv_pallas.1} parent=11 // pred_check
        %p179 = pneg %p91
      $region18: #{dsc_conv_pallas.1} parent=11 // pred_check_branch
        %181 = sbr.rel (%p179) target = $region20
      $region19: #{dsc_conv_pallas.1} parent=11 // pred_region
        _
      $region20: #{dsc_conv_pallas.1} parent=11 // pred_fallthru
        _
      // Predicated region
      $region21: #{dsc_conv_pallas.1} parent=11 // pred_check
        %p182 = pneg %p112
      $region22: #{dsc_conv_pallas.1} parent=11 // pred_check_branch
        %184 = sbr.rel (%p182) target = $region24
      $region23: #{dsc_conv_pallas.1} parent=11 // pred_region
        _
      $region24: #{dsc_conv_pallas.1} parent=11 // pred_fallthru
        _
      // Predicated region
      $region25: #{dsc_conv_pallas.1} parent=11 // pred_check
        %p185 = pneg %p133
      $region26: #{dsc_conv_pallas.1} parent=11 // pred_check_branch
        %187 = sbr.rel (%p185) target = $region28
      $region27: #{dsc_conv_pallas.1} parent=11 // pred_region
        _
      $region28: #{dsc_conv_pallas.1} parent=11 // pred_fallthru
        _
    $region12: #{dsc_conv_pallas.1} parent=5 // pred_fallthru
      _
    %p188 = scmp.lt.s32.totalorder %s11, 2
    // Predicated region
    $region29: #{dsc_conv_pallas.1} parent=5 // pred_check
      %p189 = pneg %p188
    $region30: #{dsc_conv_pallas.1} parent=5 // pred_check_branch
      %191 = sbr.rel (%p189) target = $region32
    $region31: #{dsc_conv_pallas.1} parent=5 // pred_region
      // Predicated region
      $region33: #{dsc_conv_pallas.1} parent=31 // pred_check
        %p192 = pneg %p43
      $region34: #{dsc_conv_pallas.1} parent=31 // pred_check_branch
        %194 = sbr.rel (%p192) target = $region36
      $region35: #{dsc_conv_pallas.1} parent=31 // pred_region
        %p195 = scmp.lt.s32.totalorder %s18, 1
        %s196 = scalar_select %p195, %s18, 1
        %s197 = smul.addr %s196, 32
        %s198 = smul.addr %s197, 8
        %s199 = scalar_lea.vmem %s0, %s198
      $region36: #{dsc_conv_pallas.1} parent=31 // pred_fallthru
        _
    $region32: #{dsc_conv_pallas.1} parent=5 // pred_fallthru
      _
    %p200 = scmp.le.s32.totalorder 1, %s11
    %p201 = scmp.lt.s32.totalorder %s11, 3
    %p202 = pnand %p200, %p201
    %p203 = pneg %p202
    // Predicated region
    $region37: #{dsc_conv_pallas.1} parent=5 // pred_check
      _
    $region38: #{dsc_conv_pallas.1} parent=5 // pred_check_branch
      %205 = sbr.rel (%p202) target = $region40
    $region39: #{dsc_conv_pallas.1} parent=5 // pred_region
      %s206 = ssub.s32 %s11, 1
      %p207 = scmp.lt.s32.totalorder %s20, 1
      %s208 = scalar_select %p207, %s20, 1
      %s209 = smul.addr %s208, 32
      %s210 = smul.addr %s209, 8
      %s211 = scalar_lea.vmem %s0, %s210
      %p212 = pneg %p49
      %p213 = pneg %p46
      %p214 = pneg %p70
      %p215 = pneg %p67
      %p216 = pneg %p91
      %p217 = pneg %p88
      %p218 = pneg %p112
      %p219 = pneg %p109
      %p220 = pneg %p133
      %p221 = pneg %p130
      %p222 = pneg %p161
      %p223 = pneg %p158
      %s224 = smul.u32 16, %s21
      %p225 = scmp.lt.s32.totalorder %s20, 1
      %s226 = scalar_select %p225, %s20, 1
      %p227 = scmp.lt.s32.totalorder %s224, 15
      %s228 = scalar_select %p227, %s224, 15
      %s229 = smul.addr %s228, 2
      %s230 = smul.addr %s226, 32
      %s231 = sadd.s32 %s229, %s230
      %s232 = smul.addr %s231, 8
      %s233 = scalar_lea.vmem %s5, %s232
      %p234 = scmp.lt.s32.totalorder %s20, 1
      %s235 = scalar_select %p234, %s20, 1
      %s236 = smul.addr %s235, 32
      %s237 = smul.addr %s236, 8
      %s238 = scalar_lea.vmem %s0, %s237
      %s239 = smul.u32 16, %s21
      %p240 = scmp.lt.s32.totalorder %s20, 1
      %s241 = scalar_select %p240, %s20, 1
      %p242 = scmp.lt.s32.totalorder %s239, 15
      %s243 = scalar_select %p242, %s239, 15
      %s244 = smul.addr %s243, 2
      %s245 = smul.addr %s241, 32
      %s246 = sadd.s32 %s244, %s245
      %s247 = smul.addr %s246, 8
      %s248 = scalar_lea.vmem %s5, %s247
      %s249 = smul.u32 16, %s21
      %s251 = smul.u32 %s21, 16
      %s252 = ssub.s32 %s251, 1
      %253 = vst [vmem:[#allocation2] sm:$0xff] 0.0
      %254 = vst [vmem:[#allocation2 + $0x8] sm:$0xff] 0.0
      %255 = vst [vmem:[#allocation2 + $0x10] sm:$0xff] 0.0
      %256 = vst [vmem:[#allocation2 + $0x18] sm:$0xff] 0.0
      %257 = vst [vmem:[#allocation2 + $0x20] sm:$0xff] 0.0
      %258 = vst [vmem:[#allocation2 + $0x28] sm:$0xff] 0.0
      %259 = vst [vmem:[#allocation2 + $0x30] sm:$0xff] 0.0
      %260 = vst [vmem:[#allocation2 + $0x38] sm:$0xff] 0.0
      %261 = vst [vmem:[#allocation2 + $0x40] sm:$0xff] 0.0
      %262 = vst [vmem:[#allocation2 + $0x48] sm:$0xff] 0.0
      %263 = vst [vmem:[#allocation2 + $0x50] sm:$0xff] 0.0
      %264 = vst [vmem:[#allocation2 + $0x58] sm:$0xff] 0.0
      %265 = vst [vmem:[#allocation2 + $0x60] sm:$0xff] 0.0
      %266 = vst [vmem:[#allocation2 + $0x68] sm:$0xff] 0.0
      %267 = vst [vmem:[#allocation2 + $0x70] sm:$0xff] 0.0
      %268 = vst [vmem:[#allocation2 + $0x78] sm:$0xff] 0.0
      %269 = vst [vmem:[#allocation2 + $0x80] sm:$0xff] 0.0
      %270 = vst [vmem:[#allocation2 + $0x88] sm:$0xff] 0.0
      %271 = vst [vmem:[#allocation2 + $0x90] sm:$0xff] 0.0
      %272 = vst [vmem:[#allocation2 + $0x98] sm:$0xff] 0.0
      %273 = vst [vmem:[#allocation2 + $0xa0] sm:$0xff] 0.0
      %274 = vst [vmem:[#allocation2 + $0xa8] sm:$0xff] 0.0
      %275 = vst [vmem:[#allocation2 + $0xb0] sm:$0xff] 0.0
      %276 = vst [vmem:[#allocation2 + $0xb8] sm:$0xff] 0.0
      %277 = vst [vmem:[#allocation2 + $0xc0] sm:$0xff] 0.0
      %278 = vst [vmem:[#allocation2 + $0xc8] sm:$0xff] 0.0
      %279 = vst [vmem:[#allocation2 + $0xd0] sm:$0xff] 0.0
      %280 = vst [vmem:[#allocation2 + $0xd8] sm:$0xff] 0.0
      %281 = vst [vmem:[#allocation2 + $0xe0] sm:$0xff] 0.0
      %282 = vst [vmem:[#allocation2 + $0xe8] sm:$0xff] 0.0
      %283 = vst [vmem:[#allocation2 + $0xf0] sm:$0xff] 0.0
      %284 = vst [vmem:[#allocation2 + $0xf8] sm:$0xff] 0.0
      %285 = vst [vmem:[#allocation2 + $0x100] sm:$0xff] 0.0
      %286 = vst [vmem:[#allocation2 + $0x108] sm:$0xff] 0.0
      %287 = vst [vmem:[#allocation2 + $0x110] sm:$0xff] 0.0
      %288 = vst [vmem:[#allocation2 + $0x118] sm:$0xff] 0.0
      %289 = vst [vmem:[#allocation2 + $0x120] sm:$0xff] 0.0
      %290 = vst [vmem:[#allocation2 + $0x128] sm:$0xff] 0.0
      %291 = vst [vmem:[#allocation2 + $0x130] sm:$0xff] 0.0
      %292 = vst [vmem:[#allocation2 + $0x138] sm:$0xff] 0.0
      %293 = vst [vmem:[#allocation2 + $0x140] sm:$0xff] 0.0
      %294 = vst [vmem:[#allocation2 + $0x148] sm:$0xff] 0.0
      %295 = vst [vmem:[#allocation2 + $0x150] sm:$0xff] 0.0
      %296 = vst [vmem:[#allocation2 + $0x158] sm:$0xff] 0.0
      %297 = vst [vmem:[#allocation2 + $0x160] sm:$0xff] 0.0
      %298 = vst [vmem:[#allocation2 + $0x168] sm:$0xff] 0.0
      %299 = vst [vmem:[#allocation2 + $0x170] sm:$0xff] 0.0
      %300 = vst [vmem:[#allocation2 + $0x178] sm:$0xff] 0.0
      %301 = vst [vmem:[#allocation2 + $0x180] sm:$0xff] 0.0
      %302 = vst [vmem:[#allocation2 + $0x188] sm:$0xff] 0.0
      %303 = vst [vmem:[#allocation2 + $0x190] sm:$0xff] 0.0
      %304 = vst [vmem:[#allocation2 + $0x198] sm:$0xff] 0.0
      %305 = vst [vmem:[#allocation2 + $0x1a0] sm:$0xff] 0.0
      %306 = vst [vmem:[#allocation2 + $0x1a8] sm:$0xff] 0.0
      %s307 = smul.u32 %s251, 16
      %s308 = scalar_lea.vmem %s238, %s307
      %v309 = vld [vmem:[%s308] sm:$0xff]
      %v310 = vld [vmem:[%s308 + $0x8] sm:$0xff]
      %v311 = vld [vmem:[%s308 + $0x10] sm:$0xff]
      %v312 = vld [vmem:[%s308 + $0x18] sm:$0xff]
      %v313 = vld [vmem:[%s308 + $0x20] sm:$0xff]
      %v314 = vld [vmem:[%s308 + $0x28] sm:$0xff]
      %v315 = vld [vmem:[%s308 + $0x30] sm:$0xff]
      %v316 = vld [vmem:[%s308 + $0x38] sm:$0xff]
      %v317 = vld [vmem:[%s308 + $0x40] sm:$0xff]
      %v318 = vld [vmem:[%s308 + $0x48] sm:$0xff]
      %v319 = vld [vmem:[%s308 + $0x50] sm:$0xff]
      %v320 = vld [vmem:[%s308 + $0x58] sm:$0xff]
      %v321 = vld [vmem:[%s308 + $0x60] sm:$0xff]
      %v322 = vld [vmem:[%s308 + $0x68] sm:$0xff]
      %v323 = vld [vmem:[%s308 + $0x70] sm:$0xff]
      %v324 = vld [vmem:[%s308 + $0x78] sm:$0xff]
      %v325 = vld [vmem:[%s308 + $0x80] sm:$0xff]
      %v326 = vld [vmem:[%s308 + $0x88] sm:$0xff]
      %v327 = vld [vmem:[%s308 + $0x90] sm:$0xff]
      %v328 = vld [vmem:[%s308 + $0x98] sm:$0xff]
      %v329 = vld [vmem:[%s308 + $0xa0] sm:$0xff]
      %v330 = vld [vmem:[%s308 + $0xa8] sm:$0xff]
      %v331 = vld [vmem:[%s308 + $0xb0] sm:$0xff]
      %v332 = vld [vmem:[%s308 + $0xb8] sm:$0xff]
      %v333 = vld [vmem:[%s308 + $0xc0] sm:$0xff]
      %v334 = vld [vmem:[%s308 + $0xc8] sm:$0xff]
      %v335 = vld [vmem:[%s308 + $0xd0] sm:$0xff]
      %v336 = vld [vmem:[%s308 + $0xd8] sm:$0xff]
      %v337 = vld [vmem:[%s308 + $0xe0] sm:$0xff]
      %v338 = vld [vmem:[%s308 + $0xe8] sm:$0xff]
      %v339 = vld [vmem:[%s308 + $0xf0] sm:$0xff]
      %v340 = vld [vmem:[%s308 + $0xf8] sm:$0xff]
      %s341 = scalar_lea.vmem [#allocation2], 24
      %vm342 = vcmask 31744
      %343 = vst.msk [vmem:[%s341 + $0x1] sm:$0xff] %vm342, %v309
      %344 = vst.msk [vmem:[%s341 + $0x9] sm:$0xff] %vm342, %v310
      %345 = vst.msk [vmem:[%s341 + $0x19] sm:$0xff] %vm342, %v311
      %346 = vst.msk [vmem:[%s341 + $0x21] sm:$0xff] %vm342, %v312
      %347 = vst.msk [vmem:[%s341 + $0x31] sm:$0xff] %vm342, %v313
      %348 = vst.msk [vmem:[%s341 + $0x39] sm:$0xff] %vm342, %v314
      %349 = vst.msk [vmem:[%s341 + $0x49] sm:$0xff] %vm342, %v315
      %350 = vst.msk [vmem:[%s341 + $0x51] sm:$0xff] %vm342, %v316
      %351 = vst.msk [vmem:[%s341 + $0x61] sm:$0xff] %vm342, %v317
      %352 = vst.msk [vmem:[%s341 + $0x69] sm:$0xff] %vm342, %v318
      %353 = vst.msk [vmem:[%s341 + $0x79] sm:$0xff] %vm342, %v319
      %354 = vst.msk [vmem:[%s341 + $0x81] sm:$0xff] %vm342, %v320
      %355 = vst.msk [vmem:[%s341 + $0x91] sm:$0xff] %vm342, %v321
      %356 = vst.msk [vmem:[%s341 + $0x99] sm:$0xff] %vm342, %v322
      %357 = vst.msk [vmem:[%s341 + $0xa9] sm:$0xff] %vm342, %v323
      %358 = vst.msk [vmem:[%s341 + $0xb1] sm:$0xff] %vm342, %v324
      %359 = vst.msk [vmem:[%s341 + $0xc1] sm:$0xff] %vm342, %v325
      %360 = vst.msk [vmem:[%s341 + $0xc9] sm:$0xff] %vm342, %v326
      %361 = vst.msk [vmem:[%s341 + $0xd9] sm:$0xff] %vm342, %v327
      %362 = vst.msk [vmem:[%s341 + $0xe1] sm:$0xff] %vm342, %v328
      %363 = vst.msk [vmem:[%s341 + $0xf1] sm:$0xff] %vm342, %v329
      %364 = vst.msk [vmem:[%s341 + $0xf9] sm:$0xff] %vm342, %v330
      %365 = vst.msk [vmem:[%s341 + $0x109] sm:$0xff] %vm342, %v331
      %366 = vst.msk [vmem:[%s341 + $0x111] sm:$0xff] %vm342, %v332
      %367 = vst.msk [vmem:[%s341 + $0x121] sm:$0xff] %vm342, %v333
      %368 = vst.msk [vmem:[%s341 + $0x129] sm:$0xff] %vm342, %v334
      %369 = vst.msk [vmem:[%s341 + $0x139] sm:$0xff] %vm342, %v335
      %370 = vst.msk [vmem:[%s341 + $0x141] sm:$0xff] %vm342, %v336
      %371 = vst.msk [vmem:[%s341 + $0x151] sm:$0xff] %vm342, %v337
      %372 = vst.msk [vmem:[%s341 + $0x159] sm:$0xff] %vm342, %v338
      %373 = vst.msk [vmem:[%s341 + $0x169] sm:$0xff] %vm342, %v339
      %374 = vst.msk [vmem:[%s341 + $0x171] sm:$0xff] %vm342, %v340
      %p375 = scmp.ge.s32.totalorder %s252, 0
      // Predicated region
      $region41: #{dsc_conv_pallas.1} parent=39 // pred_check
        %p376 = pneg %p375
      $region42: #{dsc_conv_pallas.1} parent=39 // pred_check_branch
        %378 = sbr.rel (%p376) target = $region44
      $region43: #{dsc_conv_pallas.1} parent=39 // pred_region
        %s379 = smul.u32 %s252, 16
        %s380 = scalar_lea.vmem %s238, %s379
        %v381 = vld [vmem:[%s380] sm:$0xff]
        %v382 = vld [vmem:[%s380 + $0x8] sm:$0xff]
        %383 = vst.msk [vmem:[#allocation2 + $0x1] sm:$0xff] %vm342, %v381
        %384 = vst.msk [vmem:[#allocation2 + $0x9] sm:$0xff] %vm342, %v382
      $region44: #{dsc_conv_pallas.1} parent=39 // pred_fallthru
        _
      %s385 = sadd.s32 %s251, 16
      %p386 = scmp.lt.s32.totalorder %s385, 16
      // Predicated region
      $region45: #{dsc_conv_pallas.1} parent=39 // pred_check
        %p387 = pneg %p386
      $region46: #{dsc_conv_pallas.1} parent=39 // pred_check_branch
        %389 = sbr.rel (%p387) target = $region48
      $region47: #{dsc_conv_pallas.1} parent=39 // pred_region
        %s390 = smul.u32 %s385, 16
        %s391 = scalar_lea.vmem %s238, %s390
        %v392 = vld [vmem:[%s391] sm:$0xff]
        %v393 = vld [vmem:[%s391 + $0x8] sm:$0xff]
        %s394 = scalar_lea.vmem [#allocation2], 408
        %395 = vst.msk [vmem:[%s394 + $0x1] sm:$0xff] %vm342, %v392
        %396 = vst.msk [vmem:[%s394 + $0x9] sm:$0xff] %vm342, %v393
      $region48: #{dsc_conv_pallas.1} parent=39 // pred_fallthru
        _
      %v397 = vld [vmem:[#allocation2] sm:$0xff]
      %v398 = vld [vmem:[#allocation2 + $0x8] sm:$0xff]
      %v399 = vld [vmem:[#allocation2 + $0x10] sm:$0xff]
      %v400 = vld [vmem:[#allocation2 + $0x18] sm:$0xff]
      %v401 = vld [vmem:[#allocation2 + $0x20] sm:$0xff]
      %v402 = vld [vmem:[#allocation2 + $0x28] sm:$0xff]
      %v403 = vld [vmem:[#allocation2 + $0x30] sm:$0xff]
      %v404 = vld [vmem:[#allocation2 + $0x38] sm:$0xff]
      %v405 = vld [vmem:[#allocation2 + $0x40] sm:$0xff]
      %v406 = vld [vmem:[#allocation2 + $0x48] sm:$0xff]
      %v407 = vld [vmem:[#allocation2 + $0x50] sm:$0xff]
      %v408 = vld [vmem:[#allocation2 + $0x58] sm:$0xff]
      %v409 = vld [vmem:[#allocation2 + $0x60] sm:$0xff]
      %v410 = vld [vmem:[#allocation2 + $0x68] sm:$0xff]
      %v411 = vld [vmem:[#allocation2 + $0x70] sm:$0xff]
      %v412 = vld [vmem:[#allocation2 + $0x78] sm:$0xff]
      %v413 = vld [vmem:[#allocation2 + $0x80] sm:$0xff]
      %v414 = vld [vmem:[#allocation2 + $0x88] sm:$0xff]
      %v415 = vld [vmem:[#allocation2 + $0x90] sm:$0xff]
      %v416 = vld [vmem:[#allocation2 + $0x98] sm:$0xff]
      %v417 = vld [vmem:[#allocation2 + $0xa0] sm:$0xff]
      %v418 = vld [vmem:[#allocation2 + $0xa8] sm:$0xff]
      %v419 = vld [vmem:[#allocation2 + $0xb0] sm:$0xff]
      %v420 = vld [vmem:[#allocation2 + $0xb8] sm:$0xff]
      %v421 = vld [vmem:[#allocation2 + $0xc0] sm:$0xff]
      %v422 = vld [vmem:[#allocation2 + $0xc8] sm:$0xff]
      %v423 = vld [vmem:[#allocation2 + $0xd0] sm:$0xff]
      %v424 = vld [vmem:[#allocation2 + $0xd8] sm:$0xff]
      %v425 = vld [vmem:[#allocation2 + $0xe0] sm:$0xff]
      %v426 = vld [vmem:[#allocation2 + $0xe8] sm:$0xff]
      %v427 = vld [vmem:[#allocation2 + $0xf0] sm:$0xff]
      %v428 = vld [vmem:[#allocation2 + $0xf8] sm:$0xff]
      %v429 = vld [vmem:[#allocation2 + $0x100] sm:$0xff]
      %v430 = vld [vmem:[#allocation2 + $0x108] sm:$0xff]
      %v431 = vld [vmem:[#allocation2 + $0x110] sm:$0xff]
      %v432 = vld [vmem:[#allocation2 + $0x118] sm:$0xff]
      %v433 = vld [vmem:[#allocation2 + $0x120] sm:$0xff]
      %v434 = vld [vmem:[#allocation2 + $0x128] sm:$0xff]
      %v435 = vld [vmem:[#allocation2 + $0x130] sm:$0xff]
      %v436 = vld [vmem:[#allocation2 + $0x138] sm:$0xff]
      %v437 = vld [vmem:[#allocation2 + $0x140] sm:$0xff]
      %v438 = vld [vmem:[#allocation2 + $0x148] sm:$0xff]
      %v439 = vld [vmem:[#allocation2 + $0x150] sm:$0xff]
      %v440 = vld [vmem:[#allocation2 + $0x158] sm:$0xff]
      %v441 = vld [vmem:[#allocation2 + $0x160] sm:$0xff]
      %v442 = vld [vmem:[#allocation2 + $0x168] sm:$0xff]
      %v443 = vld [vmem:[#allocation2 + $0x170] sm:$0xff]
      %v444 = vld [vmem:[#allocation2 + $0x178] sm:$0xff]
      %v445 = vld [vmem:[#allocation2 + $0x180] sm:$0xff]
      %v446 = vld [vmem:[#allocation2 + $0x188] sm:$0xff]
      %v447 = vld [vmem:[#allocation2 + $0x190] sm:$0xff]
      %v448 = vld [vmem:[#allocation2 + $0x198] sm:$0xff]
      %v449 = vld [vmem:[#allocation2 + $0x1a0] sm:$0xff]
      %v450 = vld [vmem:[#allocation2 + $0x1a8] sm:$0xff]
      %v451 = vld [vmem:[%s1] sm:$0x1]
      %v452 = vlaneseq
      %v453 = vshrl.u32 %v452, 7
      %v454 = vsub.s32 0, %v453
      %v455 = vrot.slane %v451, %v454
      %v456 = vmul.f32 %v397, %v455
      %v457 = vmul.f32 %v398, %v455
      %v458 = vmul.f32 %v400, %v455
      %v459 = vmul.f32 %v401, %v455
      %v460 = vmul.f32 %v403, %v455
      %v461 = vmul.f32 %v404, %v455
      %v462 = vmul.f32 %v406, %v455
      %v463 = vmul.f32 %v407, %v455
      %v464 = vmul.f32 %v409, %v455
      %v465 = vmul.f32 %v410, %v455
      %v466 = vmul.f32 %v412, %v455
      %v467 = vmul.f32 %v413, %v455
      %v468 = vmul.f32 %v415, %v455
      %v469 = vmul.f32 %v416, %v455
      %v470 = vmul.f32 %v418, %v455
      %v471 = vmul.f32 %v419, %v455
      %v472 = vmul.f32 %v421, %v455
      %v473 = vmul.f32 %v422, %v455
      %v474 = vmul.f32 %v424, %v455
      %v475 = vmul.f32 %v425, %v455
      %v476 = vmul.f32 %v427, %v455
      %v477 = vmul.f32 %v428, %v455
      %v478 = vmul.f32 %v430, %v455
      %v479 = vmul.f32 %v431, %v455
      %v480 = vmul.f32 %v433, %v455
      %v481 = vmul.f32 %v434, %v455
      %v482 = vmul.f32 %v436, %v455
      %v483 = vmul.f32 %v437, %v455
      %v484 = vmul.f32 %v439, %v455
      %v485 = vmul.f32 %v440, %v455
      %v486 = vmul.f32 %v442, %v455
      %v487 = vmul.f32 %v443, %v455
      %v488 = vadd.f32 %v456, 0.0
      %v489 = vadd.f32 %v457, 0.0
      %v490 = vadd.f32 %v458, 0.0
      %v491 = vadd.f32 %v459, 0.0
      %v492 = vadd.f32 %v460, 0.0
      %v493 = vadd.f32 %v461, 0.0
      %v494 = vadd.f32 %v462, 0.0
      %v495 = vadd.f32 %v463, 0.0
      %v496 = vadd.f32 %v464, 0.0
      %v497 = vadd.f32 %v465, 0.0
      %v498 = vadd.f32 %v466, 0.0
      %v499 = vadd.f32 %v467, 0.0
      %v500 = vadd.f32 %v468, 0.0
      %v501 = vadd.f32 %v469, 0.0
      %v502 = vadd.f32 %v470, 0.0
      %v503 = vadd.f32 %v471, 0.0
      %v504 = vadd.f32 %v472, 0.0
      %v505 = vadd.f32 %v473, 0.0
      %v506 = vadd.f32 %v474, 0.0
      %v507 = vadd.f32 %v475, 0.0
      %v508 = vadd.f32 %v476, 0.0
      %v509 = vadd.f32 %v477, 0.0
      %v510 = vadd.f32 %v478, 0.0
      %v511 = vadd.f32 %v479, 0.0
      %v512 = vadd.f32 %v480, 0.0
      %v513 = vadd.f32 %v481, 0.0
      %v514 = vadd.f32 %v482, 0.0
      %v515 = vadd.f32 %v483, 0.0
      %v516 = vadd.f32 %v484, 0.0
      %v517 = vadd.f32 %v485, 0.0
      %v518 = vadd.f32 %v486, 0.0
      %v519 = vadd.f32 %v487, 0.0
      %s520 = scalar_lea.vmem %s1, 4
      %v521 = vld [vmem:[%s520] sm:$0x1]
      %v522 = vlaneseq
      %v523 = vshrl.u32 %v522, 7
      %v524 = vsub.s32 0, %v523
      %v525 = vrot.slane %v521, %v524
      %v526 = vmul.f32 %v400, %v525
      %v527 = vmul.f32 %v401, %v525
      %v528 = vmul.f32 %v403, %v525
      %v529 = vmul.f32 %v404, %v525
      %v530 = vmul.f32 %v406, %v525
      %v531 = vmul.f32 %v407, %v525
      %v532 = vmul.f32 %v409, %v525
      %v533 = vmul.f32 %v410, %v525
      %v534 = vmul.f32 %v412, %v525
      %v535 = vmul.f32 %v413, %v525
      %v536 = vmul.f32 %v415, %v525
      %v537 = vmul.f32 %v416, %v525
      %v538 = vmul.f32 %v418, %v525
      %v539 = vmul.f32 %v419, %v525
      %v540 = vmul.f32 %v421, %v525
      %v541 = vmul.f32 %v422, %v525
      %v542 = vmul.f32 %v424, %v525
      %v543 = vmul.f32 %v425, %v525
      %v544 = vmul.f32 %v427, %v525
      %v545 = vmul.f32 %v428, %v525
      %v546 = vmul.f32 %v430, %v525
      %v547 = vmul.f32 %v431, %v525
      %v548 = vmul.f32 %v433, %v525
      %v549 = vmul.f32 %v434, %v525
      %v550 = vmul.f32 %v436, %v525
      %v551 = vmul.f32 %v437, %v525
      %v552 = vmul.f32 %v439, %v525
      %v553 = vmul.f32 %v440, %v525
      %v554 = vmul.f32 %v442, %v525
      %v555 = vmul.f32 %v443, %v525
      %v556 = vmul.f32 %v445, %v525
      %v557 = vmul.f32 %v446, %v525
      %v558 = vadd.f32 %v488, %v526
      %v559 = vadd.f32 %v489, %v527
      %v560 = vadd.f32 %v490, %v528
      %v561 = vadd.f32 %v491, %v529
      %v562 = vadd.f32 %v492, %v530
      %v563 = vadd.f32 %v493, %v531
      %v564 = vadd.f32 %v494, %v532
      %v565 = vadd.f32 %v495, %v533
      %v566 = vadd.f32 %v496, %v534
      %v567 = vadd.f32 %v497, %v535
      %v568 = vadd.f32 %v498, %v536
      %v569 = vadd.f32 %v499, %v537
      %v570 = vadd.f32 %v500, %v538
      %v571 = vadd.f32 %v501, %v539
      %v572 = vadd.f32 %v502, %v540
      %v573 = vadd.f32 %v503, %v541
      %v574 = vadd.f32 %v504, %v542
      %v575 = vadd.f32 %v505, %v543
      %v576 = vadd.f32 %v506, %v544
      %v577 = vadd.f32 %v507, %v545
      %v578 = vadd.f32 %v508, %v546
      %v579 = vadd.f32 %v509, %v547
      %v580 = vadd.f32 %v510, %v548
      %v581 = vadd.f32 %v511, %v549
      %v582 = vadd.f32 %v512, %v550
      %v583 = vadd.f32 %v513, %v551
      %v584 = vadd.f32 %v514, %v552
      %v585 = vadd.f32 %v515, %v553
      %v586 = vadd.f32 %v516, %v554
      %v587 = vadd.f32 %v517, %v555
      %v588 = vadd.f32 %v518, %v556
      %v589 = vadd.f32 %v519, %v557
      %s590 = scalar_lea.vmem %s1, 8
      %v591 = vld [vmem:[%s590] sm:$0x1]
      %v592 = vlaneseq
      %v593 = vshrl.u32 %v592, 7
      %v594 = vsub.s32 0, %v593
      %v595 = vrot.slane %v591, %v594
      %v596 = vmul.f32 %v403, %v595
      %v597 = vmul.f32 %v404, %v595
      %v598 = vmul.f32 %v406, %v595
      %v599 = vmul.f32 %v407, %v595
      %v600 = vmul.f32 %v409, %v595
      %v601 = vmul.f32 %v410, %v595
      %v602 = vmul.f32 %v412, %v595
      %v603 = vmul.f32 %v413, %v595
      %v604 = vmul.f32 %v415, %v595
      %v605 = vmul.f32 %v416, %v595
      %v606 = vmul.f32 %v418, %v595
      %v607 = vmul.f32 %v419, %v595
      %v608 = vmul.f32 %v421, %v595
      %v609 = vmul.f32 %v422, %v595
      %v610 = vmul.f32 %v424, %v595
      %v611 = vmul.f32 %v425, %v595
      %v612 = vmul.f32 %v427, %v595
      %v613 = vmul.f32 %v428, %v595
      %v614 = vmul.f32 %v430, %v595
      %v615 = vmul.f32 %v431, %v595
      %v616 = vmul.f32 %v433, %v595
      %v617 = vmul.f32 %v434, %v595
      %v618 = vmul.f32 %v436, %v595
      %v619 = vmul.f32 %v437, %v595
      %v620 = vmul.f32 %v439, %v595
      %v621 = vmul.f32 %v440, %v595
      %v622 = vmul.f32 %v442, %v595
      %v623 = vmul.f32 %v443, %v595
      %v624 = vmul.f32 %v445, %v595
      %v625 = vmul.f32 %v446, %v595
      %v626 = vmul.f32 %v448, %v595
      %v627 = vmul.f32 %v449, %v595
      %v628 = vadd.f32 %v558, %v596
      %v629 = vadd.f32 %v559, %v597
      %v630 = vadd.f32 %v560, %v598
      %v631 = vadd.f32 %v561, %v599
      %v632 = vadd.f32 %v562, %v600
      %v633 = vadd.f32 %v563, %v601
      %v634 = vadd.f32 %v564, %v602
      %v635 = vadd.f32 %v565, %v603
      %v636 = vadd.f32 %v566, %v604
      %v637 = vadd.f32 %v567, %v605
      %v638 = vadd.f32 %v568, %v606
      %v639 = vadd.f32 %v569, %v607
      %v640 = vadd.f32 %v570, %v608
      %v641 = vadd.f32 %v571, %v609
      %v642 = vadd.f32 %v572, %v610
      %v643 = vadd.f32 %v573, %v611
      %v644 = vadd.f32 %v574, %v612
      %v645 = vadd.f32 %v575, %v613
      %v646 = vadd.f32 %v576, %v614
      %v647 = vadd.f32 %v577, %v615
      %v648 = vadd.f32 %v578, %v616
      %v649 = vadd.f32 %v579, %v617
      %v650 = vadd.f32 %v580, %v618
      %v651 = vadd.f32 %v581, %v619
      %v652 = vadd.f32 %v582, %v620
      %v653 = vadd.f32 %v583, %v621
      %v654 = vadd.f32 %v584, %v622
      %v655 = vadd.f32 %v585, %v623
      %v656 = vadd.f32 %v586, %v624
      %v657 = vadd.f32 %v587, %v625
      %v658 = vadd.f32 %v588, %v626
      %v659 = vadd.f32 %v589, %v627
      %v660 = vld [vmem:[%s1 + $0x1] sm:$0x1]
      %v661 = vlaneseq
      %v662 = vshrl.u32 %v661, 7
      %v663 = vsub.s32 0, %v662
      %v664 = vrot.slane %v660, %v663
      %v665 = vmul.f32 %v397, %v664
      %v666 = vmul.f32 %v398, %v664
      %v667 = vmul.f32 %v399, %v664
      %v668 = vmul.f32 %v400, %v664
      %v669 = vmul.f32 %v401, %v664
      %v670 = vmul.f32 %v402, %v664
      %v671 = vmul.f32 %v403, %v664
      %v672 = vmul.f32 %v404, %v664
      %v673 = vmul.f32 %v405, %v664
      %v674 = vmul.f32 %v406, %v664
      %v675 = vmul.f32 %v407, %v664
      %v676 = vmul.f32 %v408, %v664
      %v677 = vmul.f32 %v409, %v664
      %v678 = vmul.f32 %v410, %v664
      %v679 = vmul.f32 %v411, %v664
      %v680 = vmul.f32 %v412, %v664
      %v681 = vmul.f32 %v413, %v664
      %v682 = vmul.f32 %v414, %v664
      %v683 = vmul.f32 %v415, %v664
      %v684 = vmul.f32 %v416, %v664
      %v685 = vmul.f32 %v417, %v664
      %v686 = vmul.f32 %v418, %v664
      %v687 = vmul.f32 %v419, %v664
      %v688 = vmul.f32 %v420, %v664
      %v689 = vmul.f32 %v421, %v664
      %v690 = vmul.f32 %v422, %v664
      %v691 = vmul.f32 %v423, %v664
      %v692 = vmul.f32 %v424, %v664
      %v693 = vmul.f32 %v425, %v664
      %v694 = vmul.f32 %v426, %v664
      %v695 = vmul.f32 %v427, %v664
      %v696 = vmul.f32 %v428, %v664
      %v697 = vmul.f32 %v429, %v664
      %v698 = vmul.f32 %v430, %v664
      %v699 = vmul.f32 %v431, %v664
      %v700 = vmul.f32 %v432, %v664
      %v701 = vmul.f32 %v433, %v664
      %v702 = vmul.f32 %v434, %v664
      %v703 = vmul.f32 %v435, %v664
      %v704 = vmul.f32 %v436, %v664
      %v705 = vmul.f32 %v437, %v664
      %v706 = vmul.f32 %v438, %v664
      %v707 = vmul.f32 %v439, %v664
      %v708 = vmul.f32 %v440, %v664
      %v709 = vmul.f32 %v441, %v664
      %v710 = vmul.f32 %v442, %v664
      %v711 = vmul.f32 %v443, %v664
      %v712 = vmul.f32 %v444, %v664
      %vm761 = vcmask 1046528
      %v762 = vrot.slane %v665, 1
      %v763 = vrot.slane %v666, 1
      %v764 = vsel %vm761, %v762, %v763
      %v765 = vrot.slane %v667, 1
      %v766 = vsel %vm761, %v763, %v765
      %v767 = vrot.slane %v668, 1
      %v768 = vrot.slane %v669, 1
      %v769 = vsel %vm761, %v767, %v768
      %v770 = vrot.slane %v670, 1
      %v771 = vsel %vm761, %v768, %v770
      %v772 = vrot.slane %v671, 1
      %v773 = vrot.slane %v672, 1
      %v774 = vsel %vm761, %v772, %v773
      %v775 = vrot.slane %v673, 1
      %v776 = vsel %vm761, %v773, %v775
      %v777 = vrot.slane %v674, 1
      %v778 = vrot.slane %v675, 1
      %v779 = vsel %vm761, %v777, %v778
      %v780 = vrot.slane %v676, 1
      %v781 = vsel %vm761, %v778, %v780
      %v782 = vrot.slane %v677, 1
      %v783 = vrot.slane %v678, 1
      %v784 = vsel %vm761, %v782, %v783
      %v785 = vrot.slane %v679, 1
      %v786 = vsel %vm761, %v783, %v785
      %v787 = vrot.slane %v680, 1
      %v788 = vrot.slane %v681, 1
      %v789 = vsel %vm761, %v787, %v788
      %v790 = vrot.slane %v682, 1
      %v791 = vsel %vm761, %v788, %v790
      %v792 = vrot.slane %v683, 1
      %v793 = vrot.slane %v684, 1
      %v794 = vsel %vm761, %v792, %v793
      %v795 = vrot.slane %v685, 1
      %v796 = vsel %vm761, %v793, %v795
      %v797 = vrot.slane %v686, 1
      %v798 = vrot.slane %v687, 1
      %v799 = vsel %vm761, %v797, %v798
      %v800 = vrot.slane %v688, 1
      %v801 = vsel %vm761, %v798, %v800
      %v802 = vrot.slane %v689, 1
      %v803 = vrot.slane %v690, 1
      %v804 = vsel %vm761, %v802, %v803
      %v805 = vrot.slane %v691, 1
      %v806 = vsel %vm761, %v803, %v805
      %v807 = vrot.slane %v692, 1
      %v808 = vrot.slane %v693, 1
      %v809 = vsel %vm761, %v807, %v808
      %v810 = vrot.slane %v694, 1
      %v811 = vsel %vm761, %v808, %v810
      %v812 = vrot.slane %v695, 1
      %v813 = vrot.slane %v696, 1
      %v814 = vsel %vm761, %v812, %v813
      %v815 = vrot.slane %v697, 1
      %v816 = vsel %vm761, %v813, %v815
      %v817 = vrot.slane %v698, 1
      %v818 = vrot.slane %v699, 1
      %v819 = vsel %vm761, %v817, %v818
      %v820 = vrot.slane %v700, 1
      %v821 = vsel %vm761, %v818, %v820
      %v822 = vrot.slane %v701, 1
      %v823 = vrot.slane %v702, 1
      %v824 = vsel %vm761, %v822, %v823
      %v825 = vrot.slane %v703, 1
      %v826 = vsel %vm761, %v823, %v825
      %v827 = vrot.slane %v704, 1
      %v828 = vrot.slane %v705, 1
      %v829 = vsel %vm761, %v827, %v828
      %v830 = vrot.slane %v706, 1
      %v831 = vsel %vm761, %v828, %v830
      %v832 = vrot.slane %v707, 1
      %v833 = vrot.slane %v708, 1
      %v834 = vsel %vm761, %v832, %v833
      %v835 = vrot.slane %v709, 1
      %v836 = vsel %vm761, %v833, %v835
      %v837 = vrot.slane %v710, 1
      %v838 = vrot.slane %v711, 1
      %v839 = vsel %vm761, %v837, %v838
      %v840 = vrot.slane %v712, 1
      %v841 = vsel %vm761, %v838, %v840
      %v874 = vadd.f32 %v628, %v764
      %v875 = vadd.f32 %v629, %v766
      %v876 = vadd.f32 %v630, %v769
      %v877 = vadd.f32 %v631, %v771
      %v878 = vadd.f32 %v632, %v774
      %v879 = vadd.f32 %v633, %v776
      %v880 = vadd.f32 %v634, %v779
      %v881 = vadd.f32 %v635, %v781
      %v882 = vadd.f32 %v636, %v784
      %v883 = vadd.f32 %v637, %v786
      %v884 = vadd.f32 %v638, %v789
      %v885 = vadd.f32 %v639, %v791
      %v886 = vadd.f32 %v640, %v794
      %v887 = vadd.f32 %v641, %v796
      %v888 = vadd.f32 %v642, %v799
      %v889 = vadd.f32 %v643, %v801
      %v890 = vadd.f32 %v644, %v804
      %v891 = vadd.f32 %v645, %v806
      %v892 = vadd.f32 %v646, %v809
      %v893 = vadd.f32 %v647, %v811
      %v894 = vadd.f32 %v648, %v814
      %v895 = vadd.f32 %v649, %v816
      %v896 = vadd.f32 %v650, %v819
      %v897 = vadd.f32 %v651, %v821
      %v898 = vadd.f32 %v652, %v824
      %v899 = vadd.f32 %v653, %v826
      %v900 = vadd.f32 %v654, %v829
      %v901 = vadd.f32 %v655, %v831
      %v902 = vadd.f32 %v656, %v834
      %v903 = vadd.f32 %v657, %v836
      %v904 = vadd.f32 %v658, %v839
      %v905 = vadd.f32 %v659, %v841
      %v906 = vld [vmem:[%s520 + $0x1] sm:$0x1]
      %v907 = vlaneseq
      %v908 = vshrl.u32 %v907, 7
      %v909 = vsub.s32 0, %v908
      %v910 = vrot.slane %v906, %v909
      %v911 = vmul.f32 %v400, %v910
      %v912 = vmul.f32 %v401, %v910
      %v913 = vmul.f32 %v402, %v910
      %v914 = vmul.f32 %v403, %v910
      %v915 = vmul.f32 %v404, %v910
      %v916 = vmul.f32 %v405, %v910
      %v917 = vmul.f32 %v406, %v910
      %v918 = vmul.f32 %v407, %v910
      %v919 = vmul.f32 %v408, %v910
      %v920 = vmul.f32 %v409, %v910
      %v921 = vmul.f32 %v410, %v910
      %v922 = vmul.f32 %v411, %v910
      %v923 = vmul.f32 %v412, %v910
      %v924 = vmul.f32 %v413, %v910
      %v925 = vmul.f32 %v414, %v910
      %v926 = vmul.f32 %v415, %v910
      %v927 = vmul.f32 %v416, %v910
      %v928 = vmul.f32 %v417, %v910
      %v929 = vmul.f32 %v418, %v910
      %v930 = vmul.f32 %v419, %v910
      %v931 = vmul.f32 %v420, %v910
      %v932 = vmul.f32 %v421, %v910
      %v933 = vmul.f32 %v422, %v910
      %v934 = vmul.f32 %v423, %v910
      %v935 = vmul.f32 %v424, %v910
      %v936 = vmul.f32 %v425, %v910
      %v937 = vmul.f32 %v426, %v910
      %v938 = vmul.f32 %v427, %v910
      %v939 = vmul.f32 %v428, %v910
      %v940 = vmul.f32 %v429, %v910
      %v941 = vmul.f32 %v430, %v910
      %v942 = vmul.f32 %v431, %v910
      %v943 = vmul.f32 %v432, %v910
      %v944 = vmul.f32 %v433, %v910
      %v945 = vmul.f32 %v434, %v910
      %v946 = vmul.f32 %v435, %v910
      %v947 = vmul.f32 %v436, %v910
      %v948 = vmul.f32 %v437, %v910
      %v949 = vmul.f32 %v438, %v910
      %v950 = vmul.f32 %v439, %v910
      %v951 = vmul.f32 %v440, %v910
      %v952 = vmul.f32 %v441, %v910
      %v953 = vmul.f32 %v442, %v910
      %v954 = vmul.f32 %v443, %v910
      %v955 = vmul.f32 %v444, %v910
      %v956 = vmul.f32 %v445, %v910
      %v957 = vmul.f32 %v446, %v910
      %v958 = vmul.f32 %v447, %v910
      %v1007 = vrot.slane %v911, 1
      %v1008 = vrot.slane %v912, 1
      %v1009 = vsel %vm761, %v1007, %v1008
      %v1010 = vrot.slane %v913, 1
      %v1011 = vsel %vm761, %v1008, %v1010
      %v1012 = vrot.slane %v914, 1
      %v1013 = vrot.slane %v915, 1
      %v1014 = vsel %vm761, %v1012, %v1013
      %v1015 = vrot.slane %v916, 1
      %v1016 = vsel %vm761, %v1013, %v1015
      %v1017 = vrot.slane %v917, 1
      %v1018 = vrot.slane %v918, 1
      %v1019 = vsel %vm761, %v1017, %v1018
      %v1020 = vrot.slane %v919, 1
      %v1021 = vsel %vm761, %v1018, %v1020
      %v1022 = vrot.slane %v920, 1
      %v1023 = vrot.slane %v921, 1
      %v1024 = vsel %vm761, %v1022, %v1023
      %v1025 = vrot.slane %v922, 1
      %v1026 = vsel %vm761, %v1023, %v1025
      %v1027 = vrot.slane %v923, 1
      %v1028 = vrot.slane %v924, 1
      %v1029 = vsel %vm761, %v1027, %v1028
      %v1030 = vrot.slane %v925, 1
      %v1031 = vsel %vm761, %v1028, %v1030
      %v1032 = vrot.slane %v926, 1
      %v1033 = vrot.slane %v927, 1
      %v1034 = vsel %vm761, %v1032, %v1033
      %v1035 = vrot.slane %v928, 1
      %v1036 = vsel %vm761, %v1033, %v1035
      %v1037 = vrot.slane %v929, 1
      %v1038 = vrot.slane %v930, 1
      %v1039 = vsel %vm761, %v1037, %v1038
      %v1040 = vrot.slane %v931, 1
      %v1041 = vsel %vm761, %v1038, %v1040
      %v1042 = vrot.slane %v932, 1
      %v1043 = vrot.slane %v933, 1
      %v1044 = vsel %vm761, %v1042, %v1043
      %v1045 = vrot.slane %v934, 1
      %v1046 = vsel %vm761, %v1043, %v1045
      %v1047 = vrot.slane %v935, 1
      %v1048 = vrot.slane %v936, 1
      %v1049 = vsel %vm761, %v1047, %v1048
      %v1050 = vrot.slane %v937, 1
      %v1051 = vsel %vm761, %v1048, %v1050
      %v1052 = vrot.slane %v938, 1
      %v1053 = vrot.slane %v939, 1
      %v1054 = vsel %vm761, %v1052, %v1053
      %v1055 = vrot.slane %v940, 1
      %v1056 = vsel %vm761, %v1053, %v1055
      %v1057 = vrot.slane %v941, 1
      %v1058 = vrot.slane %v942, 1
      %v1059 = vsel %vm761, %v1057, %v1058
      %v1060 = vrot.slane %v943, 1
      %v1061 = vsel %vm761, %v1058, %v1060
      %v1062 = vrot.slane %v944, 1
      %v1063 = vrot.slane %v945, 1
      %v1064 = vsel %vm761, %v1062, %v1063
      %v1065 = vrot.slane %v946, 1
      %v1066 = vsel %vm761, %v1063, %v1065
      %v1067 = vrot.slane %v947, 1
      %v1068 = vrot.slane %v948, 1
      %v1069 = vsel %vm761, %v1067, %v1068
      %v1070 = vrot.slane %v949, 1
      %v1071 = vsel %vm761, %v1068, %v1070
      %v1072 = vrot.slane %v950, 1
      %v1073 = vrot.slane %v951, 1
      %v1074 = vsel %vm761, %v1072, %v1073
      %v1075 = vrot.slane %v952, 1
      %v1076 = vsel %vm761, %v1073, %v1075
      %v1077 = vrot.slane %v953, 1
      %v1078 = vrot.slane %v954, 1
      %v1079 = vsel %vm761, %v1077, %v1078
      %v1080 = vrot.slane %v955, 1
      %v1081 = vsel %vm761, %v1078, %v1080
      %v1082 = vrot.slane %v956, 1
      %v1083 = vrot.slane %v957, 1
      %v1084 = vsel %vm761, %v1082, %v1083
      %v1085 = vrot.slane %v958, 1
      %v1086 = vsel %vm761, %v1083, %v1085
      %v1119 = vadd.f32 %v874, %v1009
      %v1120 = vadd.f32 %v875, %v1011
      %v1121 = vadd.f32 %v876, %v1014
      %v1122 = vadd.f32 %v877, %v1016
      %v1123 = vadd.f32 %v878, %v1019
      %v1124 = vadd.f32 %v879, %v1021
      %v1125 = vadd.f32 %v880, %v1024
      %v1126 = vadd.f32 %v881, %v1026
      %v1127 = vadd.f32 %v882, %v1029
      %v1128 = vadd.f32 %v883, %v1031
      %v1129 = vadd.f32 %v884, %v1034
      %v1130 = vadd.f32 %v885, %v1036
      %v1131 = vadd.f32 %v886, %v1039
      %v1132 = vadd.f32 %v887, %v1041
      %v1133 = vadd.f32 %v888, %v1044
      %v1134 = vadd.f32 %v889, %v1046
      %v1135 = vadd.f32 %v890, %v1049
      %v1136 = vadd.f32 %v891, %v1051
      %v1137 = vadd.f32 %v892, %v1054
      %v1138 = vadd.f32 %v893, %v1056
      %v1139 = vadd.f32 %v894, %v1059
      %v1140 = vadd.f32 %v895, %v1061
      %v1141 = vadd.f32 %v896, %v1064
      %v1142 = vadd.f32 %v897, %v1066
      %v1143 = vadd.f32 %v898, %v1069
      %v1144 = vadd.f32 %v899, %v1071
      %v1145 = vadd.f32 %v900, %v1074
      %v1146 = vadd.f32 %v901, %v1076
      %v1147 = vadd.f32 %v902, %v1079
      %v1148 = vadd.f32 %v903, %v1081
      %v1149 = vadd.f32 %v904, %v1084
      %v1150 = vadd.f32 %v905, %v1086
      %v1151 = vld [vmem:[%s590 + $0x1] sm:$0x1]
      %v1152 = vlaneseq
      %v1153 = vshrl.u32 %v1152, 7
      %v1154 = vsub.s32 0, %v1153
      %v1155 = vrot.slane %v1151, %v1154
      %v1156 = vmul.f32 %v403, %v1155
      %v1157 = vmul.f32 %v404, %v1155
      %v1158 = vmul.f32 %v405, %v1155
      %v1159 = vmul.f32 %v406, %v1155
      %v1160 = vmul.f32 %v407, %v1155
      %v1161 = vmul.f32 %v408, %v1155
      %v1162 = vmul.f32 %v409, %v1155
      %v1163 = vmul.f32 %v410, %v1155
      %v1164 = vmul.f32 %v411, %v1155
      %v1165 = vmul.f32 %v412, %v1155
      %v1166 = vmul.f32 %v413, %v1155
      %v1167 = vmul.f32 %v414, %v1155
      %v1168 = vmul.f32 %v415, %v1155
      %v1169 = vmul.f32 %v416, %v1155
      %v1170 = vmul.f32 %v417, %v1155
      %v1171 = vmul.f32 %v418, %v1155
      %v1172 = vmul.f32 %v419, %v1155
      %v1173 = vmul.f32 %v420, %v1155
      %v1174 = vmul.f32 %v421, %v1155
      %v1175 = vmul.f32 %v422, %v1155
      %v1176 = vmul.f32 %v423, %v1155
      %v1177 = vmul.f32 %v424, %v1155
      %v1178 = vmul.f32 %v425, %v1155
      %v1179 = vmul.f32 %v426, %v1155
      %v1180 = vmul.f32 %v427, %v1155
      %v1181 = vmul.f32 %v428, %v1155
      %v1182 = vmul.f32 %v429, %v1155
      %v1183 = vmul.f32 %v430, %v1155
      %v1184 = vmul.f32 %v431, %v1155
      %v1185 = vmul.f32 %v432, %v1155
      %v1186 = vmul.f32 %v433, %v1155
      %v1187 = vmul.f32 %v434, %v1155
      %v1188 = vmul.f32 %v435, %v1155
      %v1189 = vmul.f32 %v436, %v1155
      %v1190 = vmul.f32 %v437, %v1155
      %v1191 = vmul.f32 %v438, %v1155
      %v1192 = vmul.f32 %v439, %v1155
      %v1193 = vmul.f32 %v440, %v1155
      %v1194 = vmul.f32 %v441, %v1155
      %v1195 = vmul.f32 %v442, %v1155
      %v1196 = vmul.f32 %v443, %v1155
      %v1197 = vmul.f32 %v444, %v1155
      %v1198 = vmul.f32 %v445, %v1155
      %v1199 = vmul.f32 %v446, %v1155
      %v1200 = vmul.f32 %v447, %v1155
      %v1201 = vmul.f32 %v448, %v1155
      %v1202 = vmul.f32 %v449, %v1155
      %v1203 = vmul.f32 %v450, %v1155
      %v1252 = vrot.slane %v1156, 1
      %v1253 = vrot.slane %v1157, 1
      %v1254 = vsel %vm761, %v1252, %v1253
      %v1255 = vrot.slane %v1158, 1
      %v1256 = vsel %vm761, %v1253, %v1255
      %v1257 = vrot.slane %v1159, 1
      %v1258 = vrot.slane %v1160, 1
      %v1259 = vsel %vm761, %v1257, %v1258
      %v1260 = vrot.slane %v1161, 1
      %v1261 = vsel %vm761, %v1258, %v1260
      %v1262 = vrot.slane %v1162, 1
      %v1263 = vrot.slane %v1163, 1
      %v1264 = vsel %vm761, %v1262, %v1263
      %v1265 = vrot.slane %v1164, 1
      %v1266 = vsel %vm761, %v1263, %v1265
      %v1267 = vrot.slane %v1165, 1
      %v1268 = vrot.slane %v1166, 1
      %v1269 = vsel %vm761, %v1267, %v1268
      %v1270 = vrot.slane %v1167, 1
      %v1271 = vsel %vm761, %v1268, %v1270
      %v1272 = vrot.slane %v1168, 1
      %v1273 = vrot.slane %v1169, 1
      %v1274 = vsel %vm761, %v1272, %v1273
      %v1275 = vrot.slane %v1170, 1
      %v1276 = vsel %vm761, %v1273, %v1275
      %v1277 = vrot.slane %v1171, 1
      %v1278 = vrot.slane %v1172, 1
      %v1279 = vsel %vm761, %v1277, %v1278
      %v1280 = vrot.slane %v1173, 1
      %v1281 = vsel %vm761, %v1278, %v1280
      %v1282 = vrot.slane %v1174, 1
      %v1283 = vrot.slane %v1175, 1
      %v1284 = vsel %vm761, %v1282, %v1283
      %v1285 = vrot.slane %v1176, 1
      %v1286 = vsel %vm761, %v1283, %v1285
      %v1287 = vrot.slane %v1177, 1
      %v1288 = vrot.slane %v1178, 1
      %v1289 = vsel %vm761, %v1287, %v1288
      %v1290 = vrot.slane %v1179, 1
      %v1291 = vsel %vm761, %v1288, %v1290
      %v1292 = vrot.slane %v1180, 1
      %v1293 = vrot.slane %v1181, 1
      %v1294 = vsel %vm761, %v1292, %v1293
      %v1295 = vrot.slane %v1182, 1
      %v1296 = vsel %vm761, %v1293, %v1295
      %v1297 = vrot.slane %v1183, 1
      %v1298 = vrot.slane %v1184, 1
      %v1299 = vsel %vm761, %v1297, %v1298
      %v1300 = vrot.slane %v1185, 1
      %v1301 = vsel %vm761, %v1298, %v1300
      %v1302 = vrot.slane %v1186, 1
      %v1303 = vrot.slane %v1187, 1
      %v1304 = vsel %vm761, %v1302, %v1303
      %v1305 = vrot.slane %v1188, 1
      %v1306 = vsel %vm761, %v1303, %v1305
      %v1307 = vrot.slane %v1189, 1
      %v1308 = vrot.slane %v1190, 1
      %v1309 = vsel %vm761, %v1307, %v1308
      %v1310 = vrot.slane %v1191, 1
      %v1311 = vsel %vm761, %v1308, %v1310
      %v1312 = vrot.slane %v1192, 1
      %v1313 = vrot.slane %v1193, 1
      %v1314 = vsel %vm761, %v1312, %v1313
      %v1315 = vrot.slane %v1194, 1
      %v1316 = vsel %vm761, %v1313, %v1315
      %v1317 = vrot.slane %v1195, 1
      %v1318 = vrot.slane %v1196, 1
      %v1319 = vsel %vm761, %v1317, %v1318
      %v1320 = vrot.slane %v1197, 1
      %v1321 = vsel %vm761, %v1318, %v1320
      %v1322 = vrot.slane %v1198, 1
      %v1323 = vrot.slane %v1199, 1
      %v1324 = vsel %vm761, %v1322, %v1323
      %v1325 = vrot.slane %v1200, 1
      %v1326 = vsel %vm761, %v1323, %v1325
      %v1327 = vrot.slane %v1201, 1
      %v1328 = vrot.slane %v1202, 1
      %v1329 = vsel %vm761, %v1327, %v1328
      %v1330 = vrot.slane %v1203, 1
      %v1331 = vsel %vm761, %v1328, %v1330
      %v1364 = vadd.f32 %v1119, %v1254
      %v1365 = vadd.f32 %v1120, %v1256
      %v1366 = vadd.f32 %v1121, %v1259
      %v1367 = vadd.f32 %v1122, %v1261
      %v1368 = vadd.f32 %v1123, %v1264
      %v1369 = vadd.f32 %v1124, %v1266
      %v1370 = vadd.f32 %v1125, %v1269
      %v1371 = vadd.f32 %v1126, %v1271
      %v1372 = vadd.f32 %v1127, %v1274
      %v1373 = vadd.f32 %v1128, %v1276
      %v1374 = vadd.f32 %v1129, %v1279
      %v1375 = vadd.f32 %v1130, %v1281
      %v1376 = vadd.f32 %v1131, %v1284
      %v1377 = vadd.f32 %v1132, %v1286
      %v1378 = vadd.f32 %v1133, %v1289
      %v1379 = vadd.f32 %v1134, %v1291
      %v1380 = vadd.f32 %v1135, %v1294
      %v1381 = vadd.f32 %v1136, %v1296
      %v1382 = vadd.f32 %v1137, %v1299
      %v1383 = vadd.f32 %v1138, %v1301
      %v1384 = vadd.f32 %v1139, %v1304
      %v1385 = vadd.f32 %v1140, %v1306
      %v1386 = vadd.f32 %v1141, %v1309
      %v1387 = vadd.f32 %v1142, %v1311
      %v1388 = vadd.f32 %v1143, %v1314
      %v1389 = vadd.f32 %v1144, %v1316
      %v1390 = vadd.f32 %v1145, %v1319
      %v1391 = vadd.f32 %v1146, %v1321
      %v1392 = vadd.f32 %v1147, %v1324
      %v1393 = vadd.f32 %v1148, %v1326
      %v1394 = vadd.f32 %v1149, %v1329
      %v1395 = vadd.f32 %v1150, %v1331
      %v1396 = vld [vmem:[%s1 + $0x2] sm:$0x1]
      %v1397 = vlaneseq
      %v1398 = vshrl.u32 %v1397, 7
      %v1399 = vsub.s32 0, %v1398
      %v1400 = vrot.slane %v1396, %v1399
      %v1401 = vmul.f32 %v397, %v1400
      %v1402 = vmul.f32 %v398, %v1400
      %v1403 = vmul.f32 %v399, %v1400
      %v1404 = vmul.f32 %v400, %v1400
      %v1405 = vmul.f32 %v401, %v1400
      %v1406 = vmul.f32 %v402, %v1400
      %v1407 = vmul.f32 %v403, %v1400
      %v1408 = vmul.f32 %v404, %v1400
      %v1409 = vmul.f32 %v405, %v1400
      %v1410 = vmul.f32 %v406, %v1400
      %v1411 = vmul.f32 %v407, %v1400
      %v1412 = vmul.f32 %v408, %v1400
      %v1413 = vmul.f32 %v409, %v1400
      %v1414 = vmul.f32 %v410, %v1400
      %v1415 = vmul.f32 %v411, %v1400
      %v1416 = vmul.f32 %v412, %v1400
      %v1417 = vmul.f32 %v413, %v1400
      %v1418 = vmul.f32 %v414, %v1400
      %v1419 = vmul.f32 %v415, %v1400
      %v1420 = vmul.f32 %v416, %v1400
      %v1421 = vmul.f32 %v417, %v1400
      %v1422 = vmul.f32 %v418, %v1400
      %v1423 = vmul.f32 %v419, %v1400
      %v1424 = vmul.f32 %v420, %v1400
      %v1425 = vmul.f32 %v421, %v1400
      %v1426 = vmul.f32 %v422, %v1400
      %v1427 = vmul.f32 %v423, %v1400
      %v1428 = vmul.f32 %v424, %v1400
      %v1429 = vmul.f32 %v425, %v1400
      %v1430 = vmul.f32 %v426, %v1400
      %v1431 = vmul.f32 %v427, %v1400
      %v1432 = vmul.f32 %v428, %v1400
      %v1433 = vmul.f32 %v429, %v1400
      %v1434 = vmul.f32 %v430, %v1400
      %v1435 = vmul.f32 %v431, %v1400
      %v1436 = vmul.f32 %v432, %v1400
      %v1437 = vmul.f32 %v433, %v1400
      %v1438 = vmul.f32 %v434, %v1400
      %v1439 = vmul.f32 %v435, %v1400
      %v1440 = vmul.f32 %v436, %v1400
      %v1441 = vmul.f32 %v437, %v1400
      %v1442 = vmul.f32 %v438, %v1400
      %v1443 = vmul.f32 %v439, %v1400
      %v1444 = vmul.f32 %v440, %v1400
      %v1445 = vmul.f32 %v441, %v1400
      %v1446 = vmul.f32 %v442, %v1400
      %v1447 = vmul.f32 %v443, %v1400
      %v1448 = vmul.f32 %v444, %v1400
      %vm1497 = vcmask 1045504
      %v1498 = vrot.slane %v1401, 2
      %v1499 = vrot.slane %v1402, 2
      %v1500 = vsel %vm1497, %v1498, %v1499
      %v1501 = vrot.slane %v1403, 2
      %v1502 = vsel %vm1497, %v1499, %v1501
      %v1503 = vrot.slane %v1404, 2
      %v1504 = vrot.slane %v1405, 2
      %v1505 = vsel %vm1497, %v1503, %v1504
      %v1506 = vrot.slane %v1406, 2
      %v1507 = vsel %vm1497, %v1504, %v1506
      %v1508 = vrot.slane %v1407, 2
      %v1509 = vrot.slane %v1408, 2
      %v1510 = vsel %vm1497, %v1508, %v1509
      %v1511 = vrot.slane %v1409, 2
      %v1512 = vsel %vm1497, %v1509, %v1511
      %v1513 = vrot.slane %v1410, 2
      %v1514 = vrot.slane %v1411, 2
      %v1515 = vsel %vm1497, %v1513, %v1514
      %v1516 = vrot.slane %v1412, 2
      %v1517 = vsel %vm1497, %v1514, %v1516
      %v1518 = vrot.slane %v1413, 2
      %v1519 = vrot.slane %v1414, 2
      %v1520 = vsel %vm1497, %v1518, %v1519
      %v1521 = vrot.slane %v1415, 2
      %v1522 = vsel %vm1497, %v1519, %v1521
      %v1523 = vrot.slane %v1416, 2
      %v1524 = vrot.slane %v1417, 2
      %v1525 = vsel %vm1497, %v1523, %v1524
      %v1526 = vrot.slane %v1418, 2
      %v1527 = vsel %vm1497, %v1524, %v1526
      %v1528 = vrot.slane %v1419, 2
      %v1529 = vrot.slane %v1420, 2
      %v1530 = vsel %vm1497, %v1528, %v1529
      %v1531 = vrot.slane %v1421, 2
      %v1532 = vsel %vm1497, %v1529, %v1531
      %v1533 = vrot.slane %v1422, 2
      %v1534 = vrot.slane %v1423, 2
      %v1535 = vsel %vm1497, %v1533, %v1534
      %v1536 = vrot.slane %v1424, 2
      %v1537 = vsel %vm1497, %v1534, %v1536
      %v1538 = vrot.slane %v1425, 2
      %v1539 = vrot.slane %v1426, 2
      %v1540 = vsel %vm1497, %v1538, %v1539
      %v1541 = vrot.slane %v1427, 2
      %v1542 = vsel %vm1497, %v1539, %v1541
      %v1543 = vrot.slane %v1428, 2
      %v1544 = vrot.slane %v1429, 2
      %v1545 = vsel %vm1497, %v1543, %v1544
      %v1546 = vrot.slane %v1430, 2
      %v1547 = vsel %vm1497, %v1544, %v1546
      %v1548 = vrot.slane %v1431, 2
      %v1549 = vrot.slane %v1432, 2
      %v1550 = vsel %vm1497, %v1548, %v1549
      %v1551 = vrot.slane %v1433, 2
      %v1552 = vsel %vm1497, %v1549, %v1551
      %v1553 = vrot.slane %v1434, 2
      %v1554 = vrot.slane %v1435, 2
      %v1555 = vsel %vm1497, %v1553, %v1554
      %v1556 = vrot.slane %v1436, 2
      %v1557 = vsel %vm1497, %v1554, %v1556
      %v1558 = vrot.slane %v1437, 2
      %v1559 = vrot.slane %v1438, 2
      %v1560 = vsel %vm1497, %v1558, %v1559
      %v1561 = vrot.slane %v1439, 2
      %v1562 = vsel %vm1497, %v1559, %v1561
      %v1563 = vrot.slane %v1440, 2
      %v1564 = vrot.slane %v1441, 2
      %v1565 = vsel %vm1497, %v1563, %v1564
      %v1566 = vrot.slane %v1442, 2
      %v1567 = vsel %vm1497, %v1564, %v1566
      %v1568 = vrot.slane %v1443, 2
      %v1569 = vrot.slane %v1444, 2
      %v1570 = vsel %vm1497, %v1568, %v1569
      %v1571 = vrot.slane %v1445, 2
      %v1572 = vsel %vm1497, %v1569, %v1571
      %v1573 = vrot.slane %v1446, 2
      %v1574 = vrot.slane %v1447, 2
      %v1575 = vsel %vm1497, %v1573, %v1574
      %v1576 = vrot.slane %v1448, 2
      %v1577 = vsel %vm1497, %v1574, %v1576
      %v1610 = vadd.f32 %v1364, %v1500
      %v1611 = vadd.f32 %v1365, %v1502
      %v1612 = vadd.f32 %v1366, %v1505
      %v1613 = vadd.f32 %v1367, %v1507
      %v1614 = vadd.f32 %v1368, %v1510
      %v1615 = vadd.f32 %v1369, %v1512
      %v1616 = vadd.f32 %v1370, %v1515
      %v1617 = vadd.f32 %v1371, %v1517
      %v1618 = vadd.f32 %v1372, %v1520
      %v1619 = vadd.f32 %v1373, %v1522
      %v1620 = vadd.f32 %v1374, %v1525
      %v1621 = vadd.f32 %v1375, %v1527
      %v1622 = vadd.f32 %v1376, %v1530
      %v1623 = vadd.f32 %v1377, %v1532
      %v1624 = vadd.f32 %v1378, %v1535
      %v1625 = vadd.f32 %v1379, %v1537
      %v1626 = vadd.f32 %v1380, %v1540
      %v1627 = vadd.f32 %v1381, %v1542
      %v1628 = vadd.f32 %v1382, %v1545
      %v1629 = vadd.f32 %v1383, %v1547
      %v1630 = vadd.f32 %v1384, %v1550
      %v1631 = vadd.f32 %v1385, %v1552
      %v1632 = vadd.f32 %v1386, %v1555
      %v1633 = vadd.f32 %v1387, %v1557
      %v1634 = vadd.f32 %v1388, %v1560
      %v1635 = vadd.f32 %v1389, %v1562
      %v1636 = vadd.f32 %v1390, %v1565
      %v1637 = vadd.f32 %v1391, %v1567
      %v1638 = vadd.f32 %v1392, %v1570
      %v1639 = vadd.f32 %v1393, %v1572
      %v1640 = vadd.f32 %v1394, %v1575
      %v1641 = vadd.f32 %v1395, %v1577
      %v1642 = vld [vmem:[%s520 + $0x2] sm:$0x1]
      %v1643 = vlaneseq
      %v1644 = vshrl.u32 %v1643, 7
      %v1645 = vsub.s32 0, %v1644
      %v1646 = vrot.slane %v1642, %v1645
      %v1647 = vmul.f32 %v400, %v1646
      %v1648 = vmul.f32 %v401, %v1646
      %v1649 = vmul.f32 %v402, %v1646
      %v1650 = vmul.f32 %v403, %v1646
      %v1651 = vmul.f32 %v404, %v1646
      %v1652 = vmul.f32 %v405, %v1646
      %v1653 = vmul.f32 %v406, %v1646
      %v1654 = vmul.f32 %v407, %v1646
      %v1655 = vmul.f32 %v408, %v1646
      %v1656 = vmul.f32 %v409, %v1646
      %v1657 = vmul.f32 %v410, %v1646
      %v1658 = vmul.f32 %v411, %v1646
      %v1659 = vmul.f32 %v412, %v1646
      %v1660 = vmul.f32 %v413, %v1646
      %v1661 = vmul.f32 %v414, %v1646
      %v1662 = vmul.f32 %v415, %v1646
      %v1663 = vmul.f32 %v416, %v1646
      %v1664 = vmul.f32 %v417, %v1646
      %v1665 = vmul.f32 %v418, %v1646
      %v1666 = vmul.f32 %v419, %v1646
      %v1667 = vmul.f32 %v420, %v1646
      %v1668 = vmul.f32 %v421, %v1646
      %v1669 = vmul.f32 %v422, %v1646
      %v1670 = vmul.f32 %v423, %v1646
      %v1671 = vmul.f32 %v424, %v1646
      %v1672 = vmul.f32 %v425, %v1646
      %v1673 = vmul.f32 %v426, %v1646
      %v1674 = vmul.f32 %v427, %v1646
      %v1675 = vmul.f32 %v428, %v1646
      %v1676 = vmul.f32 %v429, %v1646
      %v1677 = vmul.f32 %v430, %v1646
      %v1678 = vmul.f32 %v431, %v1646
      %v1679 = vmul.f32 %v432, %v1646
      %v1680 = vmul.f32 %v433, %v1646
      %v1681 = vmul.f32 %v434, %v1646
      %v1682 = vmul.f32 %v435, %v1646
      %v1683 = vmul.f32 %v436, %v1646
      %v1684 = vmul.f32 %v437, %v1646
      %v1685 = vmul.f32 %v438, %v1646
      %v1686 = vmul.f32 %v439, %v1646
      %v1687 = vmul.f32 %v440, %v1646
      %v1688 = vmul.f32 %v441, %v1646
      %v1689 = vmul.f32 %v442, %v1646
      %v1690 = vmul.f32 %v443, %v1646
      %v1691 = vmul.f32 %v444, %v1646
      %v1692 = vmul.f32 %v445, %v1646
      %v1693 = vmul.f32 %v446, %v1646
      %v1694 = vmul.f32 %v447, %v1646
      %v1743 = vrot.slane %v1647, 2
      %v1744 = vrot.slane %v1648, 2
      %v1745 = vsel %vm1497, %v1743, %v1744
      %v1746 = vrot.slane %v1649, 2
      %v1747 = vsel %vm1497, %v1744, %v1746
      %v1748 = vrot.slane %v1650, 2
      %v1749 = vrot.slane %v1651, 2
      %v1750 = vsel %vm1497, %v1748, %v1749
      %v1751 = vrot.slane %v1652, 2
      %v1752 = vsel %vm1497, %v1749, %v1751
      %v1753 = vrot.slane %v1653, 2
      %v1754 = vrot.slane %v1654, 2
      %v1755 = vsel %vm1497, %v1753, %v1754
      %v1756 = vrot.slane %v1655, 2
      %v1757 = vsel %vm1497, %v1754, %v1756
      %v1758 = vrot.slane %v1656, 2
      %v1759 = vrot.slane %v1657, 2
      %v1760 = vsel %vm1497, %v1758, %v1759
      %v1761 = vrot.slane %v1658, 2
      %v1762 = vsel %vm1497, %v1759, %v1761
      %v1763 = vrot.slane %v1659, 2
      %v1764 = vrot.slane %v1660, 2
      %v1765 = vsel %vm1497, %v1763, %v1764
      %v1766 = vrot.slane %v1661, 2
      %v1767 = vsel %vm1497, %v1764, %v1766
      %v1768 = vrot.slane %v1662, 2
      %v1769 = vrot.slane %v1663, 2
      %v1770 = vsel %vm1497, %v1768, %v1769
      %v1771 = vrot.slane %v1664, 2
      %v1772 = vsel %vm1497, %v1769, %v1771
      %v1773 = vrot.slane %v1665, 2
      %v1774 = vrot.slane %v1666, 2
      %v1775 = vsel %vm1497, %v1773, %v1774
      %v1776 = vrot.slane %v1667, 2
      %v1777 = vsel %vm1497, %v1774, %v1776
      %v1778 = vrot.slane %v1668, 2
      %v1779 = vrot.slane %v1669, 2
      %v1780 = vsel %vm1497, %v1778, %v1779
      %v1781 = vrot.slane %v1670, 2
      %v1782 = vsel %vm1497, %v1779, %v1781
      %v1783 = vrot.slane %v1671, 2
      %v1784 = vrot.slane %v1672, 2
      %v1785 = vsel %vm1497, %v1783, %v1784
      %v1786 = vrot.slane %v1673, 2
      %v1787 = vsel %vm1497, %v1784, %v1786
      %v1788 = vrot.slane %v1674, 2
      %v1789 = vrot.slane %v1675, 2
      %v1790 = vsel %vm1497, %v1788, %v1789
      %v1791 = vrot.slane %v1676, 2
      %v1792 = vsel %vm1497, %v1789, %v1791
      %v1793 = vrot.slane %v1677, 2
      %v1794 = vrot.slane %v1678, 2
      %v1795 = vsel %vm1497, %v1793, %v1794
      %v1796 = vrot.slane %v1679, 2
      %v1797 = vsel %vm1497, %v1794, %v1796
      %v1798 = vrot.slane %v1680, 2
      %v1799 = vrot.slane %v1681, 2
      %v1800 = vsel %vm1497, %v1798, %v1799
      %v1801 = vrot.slane %v1682, 2
      %v1802 = vsel %vm1497, %v1799, %v1801
      %v1803 = vrot.slane %v1683, 2
      %v1804 = vrot.slane %v1684, 2
      %v1805 = vsel %vm1497, %v1803, %v1804
      %v1806 = vrot.slane %v1685, 2
      %v1807 = vsel %vm1497, %v1804, %v1806
      %v1808 = vrot.slane %v1686, 2
      %v1809 = vrot.slane %v1687, 2
      %v1810 = vsel %vm1497, %v1808, %v1809
      %v1811 = vrot.slane %v1688, 2
      %v1812 = vsel %vm1497, %v1809, %v1811
      %v1813 = vrot.slane %v1689, 2
      %v1814 = vrot.slane %v1690, 2
      %v1815 = vsel %vm1497, %v1813, %v1814
      %v1816 = vrot.slane %v1691, 2
      %v1817 = vsel %vm1497, %v1814, %v1816
      %v1818 = vrot.slane %v1692, 2
      %v1819 = vrot.slane %v1693, 2
      %v1820 = vsel %vm1497, %v1818, %v1819
      %v1821 = vrot.slane %v1694, 2
      %v1822 = vsel %vm1497, %v1819, %v1821
      %v1855 = vadd.f32 %v1610, %v1745
      %v1856 = vadd.f32 %v1611, %v1747
      %v1857 = vadd.f32 %v1612, %v1750
      %v1858 = vadd.f32 %v1613, %v1752
      %v1859 = vadd.f32 %v1614, %v1755
      %v1860 = vadd.f32 %v1615, %v1757
      %v1861 = vadd.f32 %v1616, %v1760
      %v1862 = vadd.f32 %v1617, %v1762
      %v1863 = vadd.f32 %v1618, %v1765
      %v1864 = vadd.f32 %v1619, %v1767
      %v1865 = vadd.f32 %v1620, %v1770
      %v1866 = vadd.f32 %v1621, %v1772
      %v1867 = vadd.f32 %v1622, %v1775
      %v1868 = vadd.f32 %v1623, %v1777
      %v1869 = vadd.f32 %v1624, %v1780
      %v1870 = vadd.f32 %v1625, %v1782
      %v1871 = vadd.f32 %v1626, %v1785
      %v1872 = vadd.f32 %v1627, %v1787
      %v1873 = vadd.f32 %v1628, %v1790
      %v1874 = vadd.f32 %v1629, %v1792
      %v1875 = vadd.f32 %v1630, %v1795
      %v1876 = vadd.f32 %v1631, %v1797
      %v1877 = vadd.f32 %v1632, %v1800
      %v1878 = vadd.f32 %v1633, %v1802
      %v1879 = vadd.f32 %v1634, %v1805
      %v1880 = vadd.f32 %v1635, %v1807
      %v1881 = vadd.f32 %v1636, %v1810
      %v1882 = vadd.f32 %v1637, %v1812
      %v1883 = vadd.f32 %v1638, %v1815
      %v1884 = vadd.f32 %v1639, %v1817
      %v1885 = vadd.f32 %v1640, %v1820
      %v1886 = vadd.f32 %v1641, %v1822
      %v1887 = vld [vmem:[%s590 + $0x2] sm:$0x1]
      %v1888 = vlaneseq
      %v1889 = vshrl.u32 %v1888, 7
      %v1890 = vsub.s32 0, %v1889
      %v1891 = vrot.slane %v1887, %v1890
      %v1892 = vmul.f32 %v403, %v1891
      %v1893 = vmul.f32 %v404, %v1891
      %v1894 = vmul.f32 %v405, %v1891
      %v1895 = vmul.f32 %v406, %v1891
      %v1896 = vmul.f32 %v407, %v1891
      %v1897 = vmul.f32 %v408, %v1891
      %v1898 = vmul.f32 %v409, %v1891
      %v1899 = vmul.f32 %v410, %v1891
      %v1900 = vmul.f32 %v411, %v1891
      %v1901 = vmul.f32 %v412, %v1891
      %v1902 = vmul.f32 %v413, %v1891
      %v1903 = vmul.f32 %v414, %v1891
      %v1904 = vmul.f32 %v415, %v1891
      %v1905 = vmul.f32 %v416, %v1891
      %v1906 = vmul.f32 %v417, %v1891
      %v1907 = vmul.f32 %v418, %v1891
      %v1908 = vmul.f32 %v419, %v1891
      %v1909 = vmul.f32 %v420, %v1891
      %v1910 = vmul.f32 %v421, %v1891
      %v1911 = vmul.f32 %v422, %v1891
      %v1912 = vmul.f32 %v423, %v1891
      %v1913 = vmul.f32 %v424, %v1891
      %v1914 = vmul.f32 %v425, %v1891
      %v1915 = vmul.f32 %v426, %v1891
      %v1916 = vmul.f32 %v427, %v1891
      %v1917 = vmul.f32 %v428, %v1891
      %v1918 = vmul.f32 %v429, %v1891
      %v1919 = vmul.f32 %v430, %v1891
      %v1920 = vmul.f32 %v431, %v1891
      %v1921 = vmul.f32 %v432, %v1891
      %v1922 = vmul.f32 %v433, %v1891
      %v1923 = vmul.f32 %v434, %v1891
      %v1924 = vmul.f32 %v435, %v1891
      %v1925 = vmul.f32 %v436, %v1891
      %v1926 = vmul.f32 %v437, %v1891
      %v1927 = vmul.f32 %v438, %v1891
      %v1928 = vmul.f32 %v439, %v1891
      %v1929 = vmul.f32 %v440, %v1891
      %v1930 = vmul.f32 %v441, %v1891
      %v1931 = vmul.f32 %v442, %v1891
      %v1932 = vmul.f32 %v443, %v1891
      %v1933 = vmul.f32 %v444, %v1891
      %v1934 = vmul.f32 %v445, %v1891
      %v1935 = vmul.f32 %v446, %v1891
      %v1936 = vmul.f32 %v447, %v1891
      %v1937 = vmul.f32 %v448, %v1891
      %v1938 = vmul.f32 %v449, %v1891
      %v1939 = vmul.f32 %v450, %v1891
      %v1988 = vrot.slane %v1892, 2
      %v1989 = vrot.slane %v1893, 2
      %v1990 = vsel %vm1497, %v1988, %v1989
      %v1991 = vrot.slane %v1894, 2
      %v1992 = vsel %vm1497, %v1989, %v1991
      %v1993 = vrot.slane %v1895, 2
      %v1994 = vrot.slane %v1896, 2
      %v1995 = vsel %vm1497, %v1993, %v1994
      %v1996 = vrot.slane %v1897, 2
      %v1997 = vsel %vm1497, %v1994, %v1996
      %v1998 = vrot.slane %v1898, 2
      %v1999 = vrot.slane %v1899, 2
      %v2000 = vsel %vm1497, %v1998, %v1999
      %v2001 = vrot.slane %v1900, 2
      %v2002 = vsel %vm1497, %v1999, %v2001
      %v2003 = vrot.slane %v1901, 2
      %v2004 = vrot.slane %v1902, 2
      %v2005 = vsel %vm1497, %v2003, %v2004
      %v2006 = vrot.slane %v1903, 2
      %v2007 = vsel %vm1497, %v2004, %v2006
      %v2008 = vrot.slane %v1904, 2
      %v2009 = vrot.slane %v1905, 2
      %v2010 = vsel %vm1497, %v2008, %v2009
      %v2011 = vrot.slane %v1906, 2
      %v2012 = vsel %vm1497, %v2009, %v2011
      %v2013 = vrot.slane %v1907, 2
      %v2014 = vrot.slane %v1908, 2
      %v2015 = vsel %vm1497, %v2013, %v2014
      %v2016 = vrot.slane %v1909, 2
      %v2017 = vsel %vm1497, %v2014, %v2016
      %v2018 = vrot.slane %v1910, 2
      %v2019 = vrot.slane %v1911, 2
      %v2020 = vsel %vm1497, %v2018, %v2019
      %v2021 = vrot.slane %v1912, 2
      %v2022 = vsel %vm1497, %v2019, %v2021
      %v2023 = vrot.slane %v1913, 2
      %v2024 = vrot.slane %v1914, 2
      %v2025 = vsel %vm1497, %v2023, %v2024
      %v2026 = vrot.slane %v1915, 2
      %v2027 = vsel %vm1497, %v2024, %v2026
      %v2028 = vrot.slane %v1916, 2
      %v2029 = vrot.slane %v1917, 2
      %v2030 = vsel %vm1497, %v2028, %v2029
      %v2031 = vrot.slane %v1918, 2
      %v2032 = vsel %vm1497, %v2029, %v2031
      %v2033 = vrot.slane %v1919, 2
      %v2034 = vrot.slane %v1920, 2
      %v2035 = vsel %vm1497, %v2033, %v2034
      %v2036 = vrot.slane %v1921, 2
      %v2037 = vsel %vm1497, %v2034, %v2036
      %v2038 = vrot.slane %v1922, 2
      %v2039 = vrot.slane %v1923, 2
      %v2040 = vsel %vm1497, %v2038, %v2039
      %v2041 = vrot.slane %v1924, 2
      %v2042 = vsel %vm1497, %v2039, %v2041
      %v2043 = vrot.slane %v1925, 2
      %v2044 = vrot.slane %v1926, 2
      %v2045 = vsel %vm1497, %v2043, %v2044
      %v2046 = vrot.slane %v1927, 2
      %v2047 = vsel %vm1497, %v2044, %v2046
      %v2048 = vrot.slane %v1928, 2
      %v2049 = vrot.slane %v1929, 2
      %v2050 = vsel %vm1497, %v2048, %v2049
      %v2051 = vrot.slane %v1930, 2
      %v2052 = vsel %vm1497, %v2049, %v2051
      %v2053 = vrot.slane %v1931, 2
      %v2054 = vrot.slane %v1932, 2
      %v2055 = vsel %vm1497, %v2053, %v2054
      %v2056 = vrot.slane %v1933, 2
      %v2057 = vsel %vm1497, %v2054, %v2056
      %v2058 = vrot.slane %v1934, 2
      %v2059 = vrot.slane %v1935, 2
      %v2060 = vsel %vm1497, %v2058, %v2059
      %v2061 = vrot.slane %v1936, 2
      %v2062 = vsel %vm1497, %v2059, %v2061
      %v2063 = vrot.slane %v1937, 2
      %v2064 = vrot.slane %v1938, 2
      %v2065 = vsel %vm1497, %v2063, %v2064
      %v2066 = vrot.slane %v1939, 2
      %v2067 = vsel %vm1497, %v2064, %v2066
      %v2100 = vadd.f32 %v1855, %v1990
      %v2101 = vadd.f32 %v1856, %v1992
      %v2102 = vadd.f32 %v1857, %v1995
      %v2103 = vadd.f32 %v1858, %v1997
      %v2104 = vadd.f32 %v1859, %v2000
      %v2105 = vadd.f32 %v1860, %v2002
      %v2106 = vadd.f32 %v1861, %v2005
      %v2107 = vadd.f32 %v1862, %v2007
      %v2108 = vadd.f32 %v1863, %v2010
      %v2109 = vadd.f32 %v1864, %v2012
      %v2110 = vadd.f32 %v1865, %v2015
      %v2111 = vadd.f32 %v1866, %v2017
      %v2112 = vadd.f32 %v1867, %v2020
      %v2113 = vadd.f32 %v1868, %v2022
      %v2114 = vadd.f32 %v1869, %v2025
      %v2115 = vadd.f32 %v1870, %v2027
      %v2116 = vadd.f32 %v1871, %v2030
      %v2117 = vadd.f32 %v1872, %v2032
      %v2118 = vadd.f32 %v1873, %v2035
      %v2119 = vadd.f32 %v1874, %v2037
      %v2120 = vadd.f32 %v1875, %v2040
      %v2121 = vadd.f32 %v1876, %v2042
      %v2122 = vadd.f32 %v1877, %v2045
      %v2123 = vadd.f32 %v1878, %v2047
      %v2124 = vadd.f32 %v1879, %v2050
      %v2125 = vadd.f32 %v1880, %v2052
      %v2126 = vadd.f32 %v1881, %v2055
      %v2127 = vadd.f32 %v1882, %v2057
      %v2128 = vadd.f32 %v1883, %v2060
      %v2129 = vadd.f32 %v1884, %v2062
      %v2130 = vadd.f32 %v1885, %v2065
      %v2131 = vadd.f32 %v1886, %v2067
      %v2132 = vld [vmem:[%s2] sm:$0x1]
      %v2134 = vlaneseq
      %v2135 = vshrl.u32 %v2134, 7
      %v2136 = vsub.s32 0, %v2135
      %v2137 = vrot.slane %v2132, %v2136
      %v2139 = vadd.f32 %v2100, %v2137
      %v2140 = vadd.f32 %v2101, %v2137
      %v2141 = vadd.f32 %v2102, %v2137
      %v2142 = vadd.f32 %v2103, %v2137
      %v2143 = vadd.f32 %v2104, %v2137
      %v2144 = vadd.f32 %v2105, %v2137
      %v2145 = vadd.f32 %v2106, %v2137
      %v2146 = vadd.f32 %v2107, %v2137
      %v2147 = vadd.f32 %v2108, %v2137
      %v2148 = vadd.f32 %v2109, %v2137
      %v2149 = vadd.f32 %v2110, %v2137
      %v2150 = vadd.f32 %v2111, %v2137
      %v2151 = vadd.f32 %v2112, %v2137
      %v2152 = vadd.f32 %v2113, %v2137
      %v2153 = vadd.f32 %v2114, %v2137
      %v2154 = vadd.f32 %v2115, %v2137
      %v2155 = vadd.f32 %v2116, %v2137
      %v2156 = vadd.f32 %v2117, %v2137
      %v2157 = vadd.f32 %v2118, %v2137
      %v2158 = vadd.f32 %v2119, %v2137
      %v2159 = vadd.f32 %v2120, %v2137
      %v2160 = vadd.f32 %v2121, %v2137
      %v2161 = vadd.f32 %v2122, %v2137
      %v2162 = vadd.f32 %v2123, %v2137
      %v2163 = vadd.f32 %v2124, %v2137
      %v2164 = vadd.f32 %v2125, %v2137
      %v2165 = vadd.f32 %v2126, %v2137
      %v2166 = vadd.f32 %v2127, %v2137
      %v2167 = vadd.f32 %v2128, %v2137
      %v2168 = vadd.f32 %v2129, %v2137
      %v2169 = vadd.f32 %v2130, %v2137
      %v2170 = vadd.f32 %v2131, %v2137
      %v2171 = vmax.f32 %v2139, 0.0
      %v2172 = vmax.f32 %v2140, 0.0
      %v2173 = vmax.f32 %v2141, 0.0
      %v2174 = vmax.f32 %v2142, 0.0
      %v2175 = vmax.f32 %v2143, 0.0
      %v2176 = vmax.f32 %v2144, 0.0
      %v2177 = vmax.f32 %v2145, 0.0
      %v2178 = vmax.f32 %v2146, 0.0
      %v2179 = vmax.f32 %v2147, 0.0
      %v2180 = vmax.f32 %v2148, 0.0
      %v2181 = vmax.f32 %v2149, 0.0
      %v2182 = vmax.f32 %v2150, 0.0
      %v2183 = vmax.f32 %v2151, 0.0
      %v2184 = vmax.f32 %v2152, 0.0
      %v2185 = vmax.f32 %v2153, 0.0
      %v2186 = vmax.f32 %v2154, 0.0
      %v2187 = vmax.f32 %v2155, 0.0
      %v2188 = vmax.f32 %v2156, 0.0
      %v2189 = vmax.f32 %v2157, 0.0
      %v2190 = vmax.f32 %v2158, 0.0
      %v2191 = vmax.f32 %v2159, 0.0
      %v2192 = vmax.f32 %v2160, 0.0
      %v2193 = vmax.f32 %v2161, 0.0
      %v2194 = vmax.f32 %v2162, 0.0
      %v2195 = vmax.f32 %v2163, 0.0
      %v2196 = vmax.f32 %v2164, 0.0
      %v2197 = vmax.f32 %v2165, 0.0
      %v2198 = vmax.f32 %v2166, 0.0
      %v2199 = vmax.f32 %v2167, 0.0
      %v2200 = vmax.f32 %v2168, 0.0
      %v2201 = vmax.f32 %v2169, 0.0
      %v2202 = vmax.f32 %v2170, 0.0
      %v2203 = vmin.f32 %v2171, 6.0
      %v2204 = vmin.f32 %v2172, 6.0
      %v2205 = vmin.f32 %v2173, 6.0
      %v2206 = vmin.f32 %v2174, 6.0
      %v2207 = vmin.f32 %v2175, 6.0
      %v2208 = vmin.f32 %v2176, 6.0
      %v2209 = vmin.f32 %v2177, 6.0
      %v2210 = vmin.f32 %v2178, 6.0
      %v2211 = vmin.f32 %v2179, 6.0
      %v2212 = vmin.f32 %v2180, 6.0
      %v2213 = vmin.f32 %v2181, 6.0
      %v2214 = vmin.f32 %v2182, 6.0
      %v2215 = vmin.f32 %v2183, 6.0
      %v2216 = vmin.f32 %v2184, 6.0
      %v2217 = vmin.f32 %v2185, 6.0
      %v2218 = vmin.f32 %v2186, 6.0
      %v2219 = vmin.f32 %v2187, 6.0
      %v2220 = vmin.f32 %v2188, 6.0
      %v2221 = vmin.f32 %v2189, 6.0
      %v2222 = vmin.f32 %v2190, 6.0
      %v2223 = vmin.f32 %v2191, 6.0
      %v2224 = vmin.f32 %v2192, 6.0
      %v2225 = vmin.f32 %v2193, 6.0
      %v2226 = vmin.f32 %v2194, 6.0
      %v2227 = vmin.f32 %v2195, 6.0
      %v2228 = vmin.f32 %v2196, 6.0
      %v2229 = vmin.f32 %v2197, 6.0
      %v2230 = vmin.f32 %v2198, 6.0
      %v2231 = vmin.f32 %v2199, 6.0
      %v2232 = vmin.f32 %v2200, 6.0
      %v2233 = vmin.f32 %v2201, 6.0
      %v2234 = vmin.f32 %v2202, 6.0
      %v2235 = vpack.c.bf16 %v2204, %v2203
      %v2236 = vpack.c.bf16 %v2206, %v2205
      %v2237 = vpack.c.bf16 %v2208, %v2207
      %v2238 = vpack.c.bf16 %v2210, %v2209
      %v2239 = vpack.c.bf16 %v2212, %v2211
      %v2240 = vpack.c.bf16 %v2214, %v2213
      %v2241 = vpack.c.bf16 %v2216, %v2215
      %v2242 = vpack.c.bf16 %v2218, %v2217
      %v2243 = vpack.c.bf16 %v2220, %v2219
      %v2244 = vpack.c.bf16 %v2222, %v2221
      %v2245 = vpack.c.bf16 %v2224, %v2223
      %v2246 = vpack.c.bf16 %v2226, %v2225
      %v2247 = vpack.c.bf16 %v2228, %v2227
      %v2248 = vpack.c.bf16 %v2230, %v2229
      %v2249 = vpack.c.bf16 %v2232, %v2231
      %v2250 = vpack.c.bf16 %v2234, %v2233
      %v2251 = vld [vmem:[%s3] sm:$0xf]
      %v2252 = vld [vmem:[%s3 + $0x4] sm:$0xf]
      %v2253 = vld [vmem:[%s3 + $0x8] sm:$0xf]
      %v2254 = vld [vmem:[%s3 + $0xc] sm:$0xf]
      %v2255 = vld [vmem:[%s3 + $0x10] sm:$0xf]
      %v2256 = vld [vmem:[%s3 + $0x14] sm:$0xf]
      %v2257 = vld [vmem:[%s3 + $0x18] sm:$0xf]
      %v2258 = vld [vmem:[%s3 + $0x1c] sm:$0xf]
      %v2259 = vld [vmem:[%s3 + $0x20] sm:$0xf]
      %v2260 = vld [vmem:[%s3 + $0x24] sm:$0xf]
      %v2261 = vld [vmem:[%s3 + $0x28] sm:$0xf]
      %v2262 = vld [vmem:[%s3 + $0x2c] sm:$0xf]
      %v2263 = vld [vmem:[%s3 + $0x30] sm:$0xf]
      %v2264 = vld [vmem:[%s3 + $0x34] sm:$0xf]
      %v2265 = vld [vmem:[%s3 + $0x38] sm:$0xf]
      %v2266 = vld [vmem:[%s3 + $0x3c] sm:$0xf]
      %v2267 = vld [vmem:[%s4] sm:$0x1]
      %v2269 = vlaneseq
      %v2270 = vshrl.u32 %v2269, 7
      %v2271 = vsub.s32 0, %v2270
      %v2272 = vrot.slane %v2267, %v2271
      %v2290 = vunpack.c.l.b16 %v2251
      %v2291 = vunpack.c.l.b16 %v2252
      %v2292 = vunpack.c.l.b16 %v2253
      %v2293 = vunpack.c.l.b16 %v2254
      %v2294 = vunpack.c.l.b16 %v2255
      %v2295 = vunpack.c.l.b16 %v2256
      %v2296 = vunpack.c.l.b16 %v2257
      %v2297 = vunpack.c.l.b16 %v2258
      %v2298 = vunpack.c.l.b16 %v2259
      %v2299 = vunpack.c.l.b16 %v2260
      %v2300 = vunpack.c.l.b16 %v2261
      %v2301 = vunpack.c.l.b16 %v2262
      %v2302 = vunpack.c.l.b16 %v2263
      %v2303 = vunpack.c.l.b16 %v2264
      %v2304 = vunpack.c.l.b16 %v2265
      %v2305 = vunpack.c.l.b16 %v2266
      %v2306 = vpack.c.b16 %v2291, %v2290
      %v2307 = vpack.c.b16 %v2293, %v2292
      %v2308 = vpack.c.b16 %v2295, %v2294
      %v2309 = vpack.c.b16 %v2297, %v2296
      %v2310 = vpack.c.b16 %v2299, %v2298
      %v2311 = vpack.c.b16 %v2301, %v2300
      %v2312 = vpack.c.b16 %v2303, %v2302
      %v2313 = vpack.c.b16 %v2305, %v2304
      %2322 = vmatprep.subr.bf16.mxu0 0
      %2323 = vmatpush1.bf16.msra.mxu0 %v2306
      %2324 = vmatprep.subr.bf16.mxu0 0
      %2325 = vmatpush1.bf16.msra.mxu0 %v2307
      %2326 = vmatprep.subr.bf16.mxu0 0
      %2327 = vmatpush1.bf16.msra.mxu0 %v2308
      %2328 = vmatprep.subr.bf16.mxu0 0
      %2329 = vmatpush1.bf16.msra.mxu0 %v2309
      %2330 = vmatprep.subr.bf16.mxu0 0
      %2331 = vmatpush1.bf16.msra.mxu0 %v2310
      %2332 = vmatprep.subr.bf16.mxu0 0
      %2333 = vmatpush1.bf16.msra.mxu0 %v2311
      %2334 = vmatprep.subr.bf16.mxu0 0
      %2335 = vmatpush1.bf16.msra.mxu0 %v2312
      %2336 = vmatprep.subr.bf16.mxu0 0
      %2337 = vmatpush1.bf16.msra.mxu0 %v2313
      %2338 = vmatprep.subr.bf16.mxu0 0
      %2339 = vmatpush1.bf16.msra.mxu0 0
      %2340 = vmatprep.subr.bf16.mxu0 0
      %2341 = vmatpush1.bf16.msra.mxu0 0
      %2342 = vmatprep.subr.bf16.mxu0 0
      %2343 = vmatpush1.bf16.msra.mxu0 0
      %2344 = vmatprep.subr.bf16.mxu0 0
      %2345 = vmatpush1.bf16.msra.mxu0 0
      %2346 = vmatprep.subr.bf16.mxu0 0
      %2347 = vmatpush1.bf16.msra.mxu0 0
      %2348 = vmatprep.subr.bf16.mxu0 0
      %2349 = vmatpush1.bf16.msra.mxu0 0
      %2350 = vmatprep.subr.bf16.mxu0 0
      %2351 = vmatpush1.bf16.msra.mxu0 0
      %2352 = vmatprep.subr.bf16.mxu0 0
      %2353 = vmatpush1.bf16.msra.mxu0 0
      %2354 = vmatprep.mubr.bf16.mxu0 0
      %2355 = vmatmul.mubr.bf16.gmra.mrb[0].mxu0 %v2235
      %v2356 = vpop.f32.mrb[0].mxu0
      %v2357 = vadd.f32 %v2272, %v2356
      %v2358 = vpop.f32.mrb[0].mxu0
      %v2359 = vpop.f32.mrb[0].mxu0
      %v2360 = vadd.f32 %v2272, %v2359
      %v2361 = vpop.f32.mrb[0].mxu0
      %2362 = vmatprep.mubr.bf16.mxu0 0
      %2363 = vmatmul.mubr.bf16.gmra.mrb[0].mxu0 %v2236
      %v2364 = vpop.f32.mrb[0].mxu0
      %v2365 = vadd.f32 %v2272, %v2364
      %v2366 = vpop.f32.mrb[0].mxu0
      %v2367 = vpop.f32.mrb[0].mxu0
      %v2368 = vadd.f32 %v2272, %v2367
      %v2369 = vpop.f32.mrb[0].mxu0
      %2370 = vmatprep.mubr.bf16.mxu0 0
      %2371 = vmatmul.mubr.bf16.gmra.mrb[0].mxu0 %v2237
      %v2372 = vpop.f32.mrb[0].mxu0
      %v2373 = vadd.f32 %v2272, %v2372
      %v2374 = vpop.f32.mrb[0].mxu0
      %v2375 = vpop.f32.mrb[0].mxu0
      %v2376 = vadd.f32 %v2272, %v2375
      %v2377 = vpop.f32.mrb[0].mxu0
      %2378 = vmatprep.mubr.bf16.mxu0 0
      %2379 = vmatmul.mubr.bf16.gmra.mrb[0].mxu0 %v2238
      %v2380 = vpop.f32.mrb[0].mxu0
      %v2381 = vadd.f32 %v2272, %v2380
      %v2382 = vpop.f32.mrb[0].mxu0
      %v2383 = vpop.f32.mrb[0].mxu0
      %v2384 = vadd.f32 %v2272, %v2383
      %v2385 = vpop.f32.mrb[0].mxu0
      %2386 = vmatprep.mubr.bf16.mxu0 0
      %2387 = vmatmul.mubr.bf16.gmra.mrb[0].mxu0 %v2239
      %v2388 = vpop.f32.mrb[0].mxu0
      %v2389 = vadd.f32 %v2272, %v2388
      %v2390 = vpop.f32.mrb[0].mxu0
      %v2391 = vpop.f32.mrb[0].mxu0
      %v2392 = vadd.f32 %v2272, %v2391
      %v2393 = vpop.f32.mrb[0].mxu0
      %2394 = vmatprep.mubr.bf16.mxu0 0
      %2395 = vmatmul.mubr.bf16.gmra.mrb[0].mxu0 %v2240
      %v2396 = vpop.f32.mrb[0].mxu0
      %v2397 = vadd.f32 %v2272, %v2396
      %v2398 = vpop.f32.mrb[0].mxu0
      %v2399 = vpop.f32.mrb[0].mxu0
      %v2400 = vadd.f32 %v2272, %v2399
      %v2401 = vpop.f32.mrb[0].mxu0
      %2402 = vmatprep.mubr.bf16.mxu0 0
      %2403 = vmatmul.mubr.bf16.gmra.mrb[0].mxu0 %v2241
      %v2404 = vpop.f32.mrb[0].mxu0
      %v2405 = vadd.f32 %v2272, %v2404
      %v2406 = vpop.f32.mrb[0].mxu0
      %v2407 = vpop.f32.mrb[0].mxu0
      %v2408 = vadd.f32 %v2272, %v2407
      %v2409 = vpop.f32.mrb[0].mxu0
      %2410 = vmatprep.mubr.bf16.mxu0 0
      %2411 = vmatmul.mubr.bf16.gmra.mrb[0].mxu0 %v2242
      %v2412 = vpop.f32.mrb[0].mxu0
      %v2413 = vadd.f32 %v2272, %v2412
      %v2414 = vpop.f32.mrb[0].mxu0
      %v2415 = vpop.f32.mrb[0].mxu0
      %v2416 = vadd.f32 %v2272, %v2415
      %v2417 = vpop.f32.mrb[0].mxu0
      %2418 = vmatprep.mubr.bf16.mxu0 0
      %2419 = vmatmul.mubr.bf16.gmra.mrb[0].mxu0 %v2243
      %v2420 = vpop.f32.mrb[0].mxu0
      %v2421 = vadd.f32 %v2272, %v2420
      %v2422 = vpop.f32.mrb[0].mxu0
      %v2423 = vpop.f32.mrb[0].mxu0
      %v2424 = vadd.f32 %v2272, %v2423
      %v2425 = vpop.f32.mrb[0].mxu0
      %2426 = vmatprep.mubr.bf16.mxu0 0
      %2427 = vmatmul.mubr.bf16.gmra.mrb[0].mxu0 %v2244
      %v2428 = vpop.f32.mrb[0].mxu0
      %v2429 = vadd.f32 %v2272, %v2428
      %v2430 = vpop.f32.mrb[0].mxu0
      %v2431 = vpop.f32.mrb[0].mxu0
      %v2432 = vadd.f32 %v2272, %v2431
      %v2433 = vpop.f32.mrb[0].mxu0
      %2434 = vmatprep.mubr.bf16.mxu0 0
      %2435 = vmatmul.mubr.bf16.gmra.mrb[0].mxu0 %v2245
      %v2436 = vpop.f32.mrb[0].mxu0
      %v2437 = vadd.f32 %v2272, %v2436
      %v2438 = vpop.f32.mrb[0].mxu0
      %v2439 = vpop.f32.mrb[0].mxu0
      %v2440 = vadd.f32 %v2272, %v2439
      %v2441 = vpop.f32.mrb[0].mxu0
      %2442 = vmatprep.mubr.bf16.mxu0 0
      %2443 = vmatmul.mubr.bf16.gmra.mrb[0].mxu0 %v2246
      %v2444 = vpop.f32.mrb[0].mxu0
      %v2445 = vadd.f32 %v2272, %v2444
      %v2446 = vpop.f32.mrb[0].mxu0
      %v2447 = vpop.f32.mrb[0].mxu0
      %v2448 = vadd.f32 %v2272, %v2447
      %v2449 = vpop.f32.mrb[0].mxu0
      %2450 = vmatprep.mubr.bf16.mxu0 0
      %2451 = vmatmul.mubr.bf16.gmra.mrb[0].mxu0 %v2247
      %v2452 = vpop.f32.mrb[0].mxu0
      %v2453 = vadd.f32 %v2272, %v2452
      %v2454 = vpop.f32.mrb[0].mxu0
      %v2455 = vpop.f32.mrb[0].mxu0
      %v2456 = vadd.f32 %v2272, %v2455
      %v2457 = vpop.f32.mrb[0].mxu0
      %2458 = vmatprep.mubr.bf16.mxu0 0
      %2459 = vmatmul.mubr.bf16.gmra.mrb[0].mxu0 %v2248
      %v2460 = vpop.f32.mrb[0].mxu0
      %v2461 = vadd.f32 %v2272, %v2460
      %v2462 = vpop.f32.mrb[0].mxu0
      %v2463 = vpop.f32.mrb[0].mxu0
      %v2464 = vadd.f32 %v2272, %v2463
      %v2465 = vpop.f32.mrb[0].mxu0
      %2466 = vmatprep.mubr.bf16.mxu0 0
      %2467 = vmatmul.mubr.bf16.gmra.mrb[0].mxu0 %v2249
      %v2468 = vpop.f32.mrb[0].mxu0
      %v2469 = vadd.f32 %v2272, %v2468
      %v2470 = vpop.f32.mrb[0].mxu0
      %v2471 = vpop.f32.mrb[0].mxu0
      %v2472 = vadd.f32 %v2272, %v2471
      %v2473 = vpop.f32.mrb[0].mxu0
      %2474 = vmatprep.mubr.bf16.mxu0 0
      %2475 = vmatmul.mubr.bf16.gmra.mrb[0].mxu0 %v2250
      %v2476 = vpop.f32.mrb[0].mxu0
      %v2477 = vadd.f32 %v2272, %v2476
      %v2478 = vpop.f32.mrb[0].mxu0
      %v2479 = vpop.f32.mrb[0].mxu0
      %v2480 = vadd.f32 %v2272, %v2479
      %v2481 = vpop.f32.mrb[0].mxu0
      %2482 = vdwg.mxu0
      %v2483 = vmax.f32 %v2357, 0.0
      %v2484 = vmax.f32 %v2360, 0.0
      %v2485 = vmax.f32 %v2365, 0.0
      %v2486 = vmax.f32 %v2368, 0.0
      %v2487 = vmax.f32 %v2373, 0.0
      %v2488 = vmax.f32 %v2376, 0.0
      %v2489 = vmax.f32 %v2381, 0.0
      %v2490 = vmax.f32 %v2384, 0.0
      %v2491 = vmax.f32 %v2389, 0.0
      %v2492 = vmax.f32 %v2392, 0.0
      %v2493 = vmax.f32 %v2397, 0.0
      %v2494 = vmax.f32 %v2400, 0.0
      %v2495 = vmax.f32 %v2405, 0.0
      %v2496 = vmax.f32 %v2408, 0.0
      %v2497 = vmax.f32 %v2413, 0.0
      %v2498 = vmax.f32 %v2416, 0.0
      %v2499 = vmax.f32 %v2421, 0.0
      %v2500 = vmax.f32 %v2424, 0.0
      %v2501 = vmax.f32 %v2429, 0.0
      %v2502 = vmax.f32 %v2432, 0.0
      %v2503 = vmax.f32 %v2437, 0.0
      %v2504 = vmax.f32 %v2440, 0.0
      %v2505 = vmax.f32 %v2445, 0.0
      %v2506 = vmax.f32 %v2448, 0.0
      %v2507 = vmax.f32 %v2453, 0.0
      %v2508 = vmax.f32 %v2456, 0.0
      %v2509 = vmax.f32 %v2461, 0.0
      %v2510 = vmax.f32 %v2464, 0.0
      %v2511 = vmax.f32 %v2469, 0.0
      %v2512 = vmax.f32 %v2472, 0.0
      %v2513 = vmax.f32 %v2477, 0.0
      %v2514 = vmax.f32 %v2480, 0.0
      %v2515 = vmin.f32 %v2483, 6.0
      %v2516 = vmin.f32 %v2484, 6.0
      %v2517 = vmin.f32 %v2485, 6.0
      %v2518 = vmin.f32 %v2486, 6.0
      %v2519 = vmin.f32 %v2487, 6.0
      %v2520 = vmin.f32 %v2488, 6.0
      %v2521 = vmin.f32 %v2489, 6.0
      %v2522 = vmin.f32 %v2490, 6.0
      %v2523 = vmin.f32 %v2491, 6.0
      %v2524 = vmin.f32 %v2492, 6.0
      %v2525 = vmin.f32 %v2493, 6.0
      %v2526 = vmin.f32 %v2494, 6.0
      %v2527 = vmin.f32 %v2495, 6.0
      %v2528 = vmin.f32 %v2496, 6.0
      %v2529 = vmin.f32 %v2497, 6.0
      %v2530 = vmin.f32 %v2498, 6.0
      %v2531 = vmin.f32 %v2499, 6.0
      %v2532 = vmin.f32 %v2500, 6.0
      %v2533 = vmin.f32 %v2501, 6.0
      %v2534 = vmin.f32 %v2502, 6.0
      %v2535 = vmin.f32 %v2503, 6.0
      %v2536 = vmin.f32 %v2504, 6.0
      %v2537 = vmin.f32 %v2505, 6.0
      %v2538 = vmin.f32 %v2506, 6.0
      %v2539 = vmin.f32 %v2507, 6.0
      %v2540 = vmin.f32 %v2508, 6.0
      %v2541 = vmin.f32 %v2509, 6.0
      %v2542 = vmin.f32 %v2510, 6.0
      %v2543 = vmin.f32 %v2511, 6.0
      %v2544 = vmin.f32 %v2512, 6.0
      %v2545 = vmin.f32 %v2513, 6.0
      %v2546 = vmin.f32 %v2514, 6.0
      %2547 = vst [vmem:[%s248] sm:$0xff] %v2515
      %2548 = vst [vmem:[%s248 + $0x8] sm:$0xff] %v2516
      %2549 = vst [vmem:[%s248 + $0x10] sm:$0xff] %v2517
      %2550 = vst [vmem:[%s248 + $0x18] sm:$0xff] %v2518
      %2551 = vst [vmem:[%s248 + $0x20] sm:$0xff] %v2519
      %2552 = vst [vmem:[%s248 + $0x28] sm:$0xff] %v2520
      %2553 = vst [vmem:[%s248 + $0x30] sm:$0xff] %v2521
      %2554 = vst [vmem:[%s248 + $0x38] sm:$0xff] %v2522
      %2555 = vst [vmem:[%s248 + $0x40] sm:$0xff] %v2523
      %2556 = vst [vmem:[%s248 + $0x48] sm:$0xff] %v2524
      %2557 = vst [vmem:[%s248 + $0x50] sm:$0xff] %v2525
      %2558 = vst [vmem:[%s248 + $0x58] sm:$0xff] %v2526
      %2559 = vst [vmem:[%s248 + $0x60] sm:$0xff] %v2527
      %2560 = vst [vmem:[%s248 + $0x68] sm:$0xff] %v2528
      %2561 = vst [vmem:[%s248 + $0x70] sm:$0xff] %v2529
      %2562 = vst [vmem:[%s248 + $0x78] sm:$0xff] %v2530
      %2563 = vst [vmem:[%s248 + $0x80] sm:$0xff] %v2531
      %2564 = vst [vmem:[%s248 + $0x88] sm:$0xff] %v2532
      %2565 = vst [vmem:[%s248 + $0x90] sm:$0xff] %v2533
      %2566 = vst [vmem:[%s248 + $0x98] sm:$0xff] %v2534
      %2567 = vst [vmem:[%s248 + $0xa0] sm:$0xff] %v2535
      %2568 = vst [vmem:[%s248 + $0xa8] sm:$0xff] %v2536
      %2569 = vst [vmem:[%s248 + $0xb0] sm:$0xff] %v2537
      %2570 = vst [vmem:[%s248 + $0xb8] sm:$0xff] %v2538
      %2571 = vst [vmem:[%s248 + $0xc0] sm:$0xff] %v2539
      %2572 = vst [vmem:[%s248 + $0xc8] sm:$0xff] %v2540
      %2573 = vst [vmem:[%s248 + $0xd0] sm:$0xff] %v2541
      %2574 = vst [vmem:[%s248 + $0xd8] sm:$0xff] %v2542
      %2575 = vst [vmem:[%s248 + $0xe0] sm:$0xff] %v2543
      %2576 = vst [vmem:[%s248 + $0xe8] sm:$0xff] %v2544
      %2577 = vst [vmem:[%s248 + $0xf0] sm:$0xff] %v2545
      %2578 = vst [vmem:[%s248 + $0xf8] sm:$0xff] %v2546
      %s2579 = smul.u32 16, %s21
      %p2580 = scmp.lt.s32.totalorder %s20, 1
      %s2581 = scalar_select %p2580, %s20, 1
      %p2582 = scmp.lt.s32.totalorder %s2579, 15
      %s2583 = scalar_select %p2582, %s2579, 15
      %s2584 = smul.addr %s2583, 2
      %s2585 = smul.addr %s2581, 32
      %s2586 = sadd.s32 %s2584, %s2585
      %s2587 = smul.addr %s2586, 8
      %s2588 = scalar_lea.vmem %s5, %s2587
      // Predicated region
      $region49: #{dsc_conv_pallas.1} parent=39 // pred_check
        %p2589 = pneg %p158
      $region50: #{dsc_conv_pallas.1} parent=39 // pred_check_branch
        %2591 = sbr.rel (%p2589) target = $region52
      $region51: #{dsc_conv_pallas.1} parent=39 // pred_region
        %s2592 = smul.u32 16, %s21
      $region52: #{dsc_conv_pallas.1} parent=39 // pred_fallthru
        _
    $region40: #{dsc_conv_pallas.1} parent=5 // pred_fallthru
      _
    %p2593 = scmp.le.s32.totalorder 2, %s11
    // Predicated region
    $region53: #{dsc_conv_pallas.1} parent=5 // pred_check
      %p2594 = pneg %p2593
    $region54: #{dsc_conv_pallas.1} parent=5 // pred_check_branch
      %2596 = sbr.rel (%p2594) target = $region56
    $region55: #{dsc_conv_pallas.1} parent=5 // pred_region
      %s2597 = ssub.s32 %s11, 2
      // Predicated region
      $region57: #{dsc_conv_pallas.1} parent=55 // pred_check
        %p2598 = pneg %p164
      $region58: #{dsc_conv_pallas.1} parent=55 // pred_check_branch
        %2600 = sbr.rel (%p2598) target = $region60
      $region59: #{dsc_conv_pallas.1} parent=55 // pred_region
        %s2601 = smul.u32 16, %s23
        %p2602 = scmp.lt.s32.totalorder %s22, 1
        %s2603 = scalar_select %p2602, %s22, 1
        %p2604 = scmp.lt.s32.totalorder %s2601, 15
        %s2605 = scalar_select %p2604, %s2601, 15
        %s2606 = smul.addr %s2605, 2
        %s2607 = smul.addr %s2603, 32
        %s2608 = sadd.s32 %s2606, %s2607
        %s2609 = smul.addr %s2608, 8
        %s2610 = scalar_lea.vmem %s5, %s2609
      $region60: #{dsc_conv_pallas.1} parent=55 // pred_fallthru
        _
    $region56: #{dsc_conv_pallas.1} parent=5 // pred_fallthru
      _
  $region6: #{dsc_conv_pallas.1} parent=0 // loop_footer
    %s15 = sadd.s32 1, %s11
  $region7: #{dsc_conv_pallas.1} parent=0 // loop_footer_branch
    %10 = sbr.rel target = $region3
  $region8: #{dsc_conv_pallas.1} parent=0 // loop_exit
    _

</llo_original>
